<compile_context>
chip_gen: v5e
topology: v5e:2x2
jax: 0.10.0
libtpu: 0.0.40
codegen_flags: <defaults>
</compile_context>

<pallas_src>
import functools

import jax
import jax.numpy as jnp
from jax.experimental import pallas as pl
from jax.experimental.pallas import tpu as pltpu


def vae_encoder_kernel(x_ref, w1_ref, b1_ref, w23_ref, b23_ref, eps_ref,
                       z_ref, kl_ref, *, batch, latent, lat_pad, m_tile):
    # Stage 1: h = relu(x @ W1 + b1)   (bf16 operands, f32 accumulation on MXU)
    x = x_ref[...].astype(jnp.bfloat16)                       # (m_tile, 784)
    h = jnp.dot(x, w1_ref[...],
                preferred_element_type=jnp.float32) + b1_ref[...]
    h = jnp.maximum(h, 0.0)                                   # (m_tile, 512) f32

    # Stage 2: fused linear2|linear3, each half padded to 128 output lanes.
    out = jnp.dot(h.astype(jnp.bfloat16), w23_ref[...],
                  preferred_element_type=jnp.float32) + b23_ref[...]
    mu = out[:, :lat_pad]                                     # (m_tile, lat_pad)
    s_pre = out[:, lat_pad:]                                  # log(sigma)
    sigma = jnp.exp(s_pre)

    # Reparameterization: z = mu + sigma * eps  (lane-dense 128-wide store).
    z_ref[...] = (mu + sigma * eps_ref[...]).astype(z_ref.dtype)

    # KL = sum(sigma^2 + mu^2 - log(sigma) - 1/2) over REAL rows/lanes of this tile.
    kl_terms = sigma * sigma + mu * mu - s_pre - 0.5
    row = (jax.lax.broadcasted_iota(jnp.int32, kl_terms.shape, 0)
           + pl.program_id(0) * m_tile)
    col = jax.lax.broadcasted_iota(jnp.int32, kl_terms.shape, 1)
    kl_terms = jnp.where((row < batch) & (col < latent), kl_terms, 0.0)
    # Per-tile partial: broadcast the scalar over a lane-dense (1, 8, 128) block.
    kl_ref[...] = jnp.full(kl_ref.shape, jnp.sum(kl_terms), dtype=jnp.float32)


def pack_params(params):
    """One-time packing: bf16 weights, fused + lane-padded mu|log-sigma head."""
    w1, b1, w2, b2, w3, b3 = params
    latent = w2.shape[1]
    lat_pad = max(128, -(-latent // 128) * 128)
    w1_bf = w1.astype(jnp.bfloat16)                           # (784, 512)
    b1_2d = b1.reshape(1, -1).astype(jnp.float32)             # (1, 512)
    w2p = jnp.pad(w2, ((0, 0), (0, lat_pad - latent)))
    w3p = jnp.pad(w3, ((0, 0), (0, lat_pad - latent)))
    w23_bf = jnp.concatenate([w2p, w3p], axis=1).astype(jnp.bfloat16)  # (512, 2*lat_pad)
    b2p = jnp.pad(b2, (0, lat_pad - latent))
    b3p = jnp.pad(b3, (0, lat_pad - latent))
    b23_2d = jnp.concatenate([b2p, b3p]).reshape(1, -1).astype(jnp.float32)
    return (w1_bf, b1_2d, w23_bf, b23_2d)


@jax.jit
def variational_encoder_forward(x_nchw, packed, eps):
    """x_nchw: (B, 1, 28, 28) f32.  Returns (z (B, latent), kl scalar)."""
    w1_bf, b1_2d, w23_bf, b23_2d = packed
    B = x_nchw.shape[0]
    latent = eps.shape[1]
    in_dim, hidden = w1_bf.shape
    lat_pad = w23_bf.shape[1] // 2

    x = x_nchw.reshape(B, -1).astype(jnp.float32)             # torch.flatten(x, 1)

    # Row tiling: 128 rows per grid step (fills the MXU on all generations);
    # for tiny batches use the 8-aligned batch so we don't pad to 128.
    m_tile = min(128, max(8, -(-B // 8) * 8))
    B_pad = -(-B // m_tile) * m_tile
    n_tiles = B_pad // m_tile

    x = jnp.pad(x, ((0, B_pad - B), (0, 0)))
    eps_p = jnp.pad(eps.astype(jnp.float32),
                    ((0, B_pad - B), (0, lat_pad - latent)))

    kernel = functools.partial(vae_encoder_kernel, batch=B, latent=latent,
                               lat_pad=lat_pad, m_tile=m_tile)

    cost = pl.CostEstimate(
        flops=2 * B_pad * (in_dim * hidden + hidden * 2 * lat_pad),
        transcendentals=B_pad * lat_pad,
        bytes_accessed=(w1_bf.size * 2 + w23_bf.size * 2
                        + (b1_2d.size + b23_2d.size) * 4
                        + x.size * 4 + eps_p.size * 4
                        + B_pad * lat_pad * 4 + n_tiles * 8 * 128 * 4),
    )

    z_pad, kl_parts = pl.pallas_call(
        kernel,
        out_shape=(
            jax.ShapeDtypeStruct((B_pad, lat_pad), jnp.float32),
            jax.ShapeDtypeStruct((n_tiles, 8, 128), jnp.float32),
        ),
        grid=(n_tiles,),
        in_specs=[
            pl.BlockSpec((m_tile, in_dim), lambda i: (i, 0)),        # x tile
            pl.BlockSpec((in_dim, hidden), lambda i: (0, 0)),        # W1 (resident)
            pl.BlockSpec((1, hidden), lambda i: (0, 0)),             # b1
            pl.BlockSpec((hidden, 2 * lat_pad), lambda i: (0, 0)),   # W2|W3 (resident)
            pl.BlockSpec((1, 2 * lat_pad), lambda i: (0, 0)),        # b2|b3
            pl.BlockSpec((m_tile, lat_pad), lambda i: (i, 0)),       # eps tile
        ],
        out_specs=(
            pl.BlockSpec((m_tile, lat_pad), lambda i: (i, 0)),       # z tile
            pl.BlockSpec((1, 8, 128), lambda i: (i, 0, 0)),          # KL partial
        ),
        compiler_params=pltpu.CompilerParams(
            dimension_semantics=("parallel",)),
        cost_estimate=cost,
    )(x, w1_bf, b1_2d, w23_bf, b23_2d, eps_p)

    return z_pad[:B, :latent], jnp.sum(kl_parts[:, 0, 0])


def init_params(key, latent_dims):
    """Deterministic synthetic init matching nn.Linear(784,512)/(512,latent)."""
    k1, k2, k3, k4, k5, k6 = jax.random.split(key, 6)
    # weights stored as (in_features, out_features)  (== torch weight.T)
    w1 = jax.random.normal(k1, (784, 512), jnp.float32) * 0.02
    b1 = jax.random.normal(k2, (512,), jnp.float32) * 0.01
    w2 = jax.random.normal(k3, (512, latent_dims), jnp.float32) * 0.02
    b2 = jax.random.normal(k4, (latent_dims,), jnp.float32) * 0.01
    w3 = jax.random.normal(k5, (512, latent_dims), jnp.float32) * 0.02
    b3 = jax.random.normal(k6, (latent_dims,), jnp.float32) * 0.01
    return (w1, b1, w2, b2, w3, b3)


if __name__ == "__main__":
    key = jax.random.PRNGKey(0)
    k_params, k_x, k_eps = jax.random.split(key, 3)

    latent_dims = 32
    batch = 2

    params = init_params(k_params, latent_dims)
    packed = pack_params(params)                      # one-time weight packing
    x = jax.random.normal(k_x, (batch, 1, 28, 28), jnp.float32)   # MNIST-like NCHW
    # eps replaces self.N.sample(mu.shape) — drawn deterministically outside the kernel
    eps = jax.random.normal(k_eps, (batch, latent_dims), jnp.float32)

    z, kl = variational_encoder_forward(x, packed, eps)
    jax.block_until_ready((z, kl))

    # Pure-JAX reference mimicking the bf16 weight/activation rounding
    # (f32 accumulation), so tolerances stay tight.
    w1, b1, w2, b2, w3, b3 = params
    xf = x.reshape(batch, -1).astype(jnp.bfloat16).astype(jnp.float32)
    w1f = w1.astype(jnp.bfloat16).astype(jnp.float32)
    w2f = w2.astype(jnp.bfloat16).astype(jnp.float32)
    w3f = w3.astype(jnp.bfloat16).astype(jnp.float32)
    h_ref = jnp.maximum(xf @ w1f + b1, 0.0)
    hb = h_ref.astype(jnp.bfloat16).astype(jnp.float32)
    mu_ref = hb @ w2f + b2
    s_ref = hb @ w3f + b3
    sigma_ref = jnp.exp(s_ref)
    z_ref = mu_ref + sigma_ref * eps
    kl_ref = jnp.sum(sigma_ref ** 2 + mu_ref ** 2 - jnp.log(sigma_ref) - 0.5)

    assert jnp.allclose(z, z_ref, atol=2e-2, rtol=2e-2)
    assert jnp.allclose(kl, kl_ref, atol=2e-1, rtol=2e-2)

    print("KERNEL_OK")
</pallas_src>

<mosaic_0001>
module attributes {stable_mosaic.version = 11 : i64} {
  func.func @vae_encoder_kernel(%arg0: i32, %arg1: memref<8x784xf32, #tpu.memory_space<vmem>>, %arg2: memref<784x512xbf16, #tpu.memory_space<vmem>>, %arg3: memref<1x512xf32, #tpu.memory_space<vmem>>, %arg4: memref<512x256xbf16, #tpu.memory_space<vmem>>, %arg5: memref<1x256xf32, #tpu.memory_space<vmem>>, %arg6: memref<8x128xf32, #tpu.memory_space<vmem>>, %arg7: memref<8x128xf32, #tpu.memory_space<vmem>>, %arg8: memref<1x8x128xf32, #tpu.memory_space<vmem>>) attributes {dimension_semantics = [#tpu.dimension_semantics<parallel>], iteration_bounds = array<i64: 1>, scalar_prefetch = 0 : i64, scratch_operands = 0 : i64, tpu.core_type = #tpu.core_type<tc>, window_params = [{transform_indices = @transform_0, window_bounds = array<i64: 8, 784>}, {pipeline_mode = #tpu.pipeline_mode<synchronous>, transform_indices = @transform_1, window_bounds = array<i64: 784, 512>}, {pipeline_mode = #tpu.pipeline_mode<synchronous>, transform_indices = @transform_2, window_bounds = array<i64: 1, 512>}, {pipeline_mode = #tpu.pipeline_mode<synchronous>, transform_indices = @transform_3, window_bounds = array<i64: 512, 256>}, {pipeline_mode = #tpu.pipeline_mode<synchronous>, transform_indices = @transform_4, window_bounds = array<i64: 1, 256>}, {transform_indices = @transform_5, window_bounds = array<i64: 8, 128>}, {transform_indices = @transform_6, window_bounds = array<i64: 8, 128>}, {transform_indices = @transform_7, window_bounds = array<i64: 1, 8, 128>}]} {
    %c0 = arith.constant 0 : index
    %c0_0 = arith.constant 0 : index
    %0 = vector.load %arg1[%c0, %c0_0] : memref<8x784xf32, #tpu.memory_space<vmem>>, vector<8x784xf32>
    %1 = arith.truncf %0 : vector<8x784xf32> to vector<8x784xbf16>
    %c0_1 = arith.constant 0 : index
    %c0_2 = arith.constant 0 : index
    %2 = vector.load %arg2[%c0_1, %c0_2] : memref<784x512xbf16, #tpu.memory_space<vmem>>, vector<784x512xbf16>
    %cst = arith.constant dense<0.000000e+00> : vector<8x512xf32>
    %3 = tpu.matmul %1, %2, %cst {dimension_numbers = #tpu.dot_dimension_numbers<[1], [0], [0], [1], [0, 0, 1, 1], [], []>} : vector<8x784xbf16>, vector<784x512xbf16>, vector<8x512xf32> -> vector<8x512xf32>
    %c0_3 = arith.constant 0 : index
    %c0_4 = arith.constant 0 : index
    %4 = vector.load %arg3[%c0_3, %c0_4] : memref<1x512xf32, #tpu.memory_space<vmem>>, vector<1x512xf32>
    %5 = vector.broadcast %4 : vector<1x512xf32> to vector<8x512xf32>
    %6 = arith.addf %3, %5 : vector<8x512xf32>
    %cst_5 = arith.constant 0.000000e+00 : f32
    %7 = vector.broadcast %cst_5 : f32 to vector<8x512xf32>
    %8 = arith.maximumf %6, %7 : vector<8x512xf32>
    %9 = arith.truncf %8 : vector<8x512xf32> to vector<8x512xbf16>
    %c0_6 = arith.constant 0 : index
    %c0_7 = arith.constant 0 : index
    %10 = vector.load %arg4[%c0_6, %c0_7] : memref<512x256xbf16, #tpu.memory_space<vmem>>, vector<512x256xbf16>
    %cst_8 = arith.constant dense<0.000000e+00> : vector<8x256xf32>
    %11 = tpu.matmul %9, %10, %cst_8 {dimension_numbers = #tpu.dot_dimension_numbers<[1], [0], [0], [1], [0, 0, 1, 1], [], []>} : vector<8x512xbf16>, vector<512x256xbf16>, vector<8x256xf32> -> vector<8x256xf32>
    %c0_9 = arith.constant 0 : index
    %c0_10 = arith.constant 0 : index
    %12 = vector.load %arg5[%c0_9, %c0_10] : memref<1x256xf32, #tpu.memory_space<vmem>>, vector<1x256xf32>
    %13 = vector.broadcast %12 : vector<1x256xf32> to vector<8x256xf32>
    %14 = arith.addf %11, %13 : vector<8x256xf32>
    %15 = vector.extract_strided_slice %14 {offsets = [0, 0], sizes = [8, 128], strides = [1, 1]} : vector<8x256xf32> to vector<8x128xf32>
    %16 = vector.extract_strided_slice %14 {offsets = [0, 128], sizes = [8, 128], strides = [1, 1]} : vector<8x256xf32> to vector<8x128xf32>
    %17 = math.exp %16 : vector<8x128xf32>
    %c0_11 = arith.constant 0 : index
    %c0_12 = arith.constant 0 : index
    %18 = vector.load %arg6[%c0_11, %c0_12] : memref<8x128xf32, #tpu.memory_space<vmem>>, vector<8x128xf32>
    %19 = arith.mulf %17, %18 : vector<8x128xf32>
    %20 = arith.addf %15, %19 : vector<8x128xf32>
    %c0_13 = arith.constant 0 : index
    %c0_14 = arith.constant 0 : index
    %21 = vector.load %arg7[%c0_13, %c0_14] : memref<8x128xf32, #tpu.memory_space<vmem>>, vector<8x128xf32>
    tpu.vector_store %arg7[%c0_13, %c0_14], %20 {strides = array<i32>} : memref<8x128xf32, #tpu.memory_space<vmem>>, vector<8x128xf32>,
    %22 = arith.mulf %17, %17 : vector<8x128xf32>
    %23 = arith.mulf %15, %15 : vector<8x128xf32>
    %24 = arith.addf %22, %23 : vector<8x128xf32>
    %25 = arith.subf %24, %16 : vector<8x128xf32>
    %cst_15 = arith.constant 5.000000e-01 : f32
    %26 = vector.broadcast %cst_15 : f32 to vector<8x128xf32>
    %27 = arith.subf %25, %26 : vector<8x128xf32>
    %28 = tpu.iota {dimensions = array<i32: 0>} : vector<8x128xi32>
    %c8_i32 = arith.constant 8 : i32
    %29 = arith.muli %arg0, %c8_i32 : i32
    %30 = vector.broadcast %29 : i32 to vector<8x128xi32>
    %31 = arith.addi %28, %30 : vector<8x128xi32>
    %32 = tpu.iota {dimensions = array<i32: 1>} : vector<8x128xi32>
    %c2_i32 = arith.constant 2 : i32
    %33 = vector.broadcast %c2_i32 : i32 to vector<8x128xi32>
    %34 = arith.cmpi slt, %31, %33 : vector<8x128xi32>
    %c32_i32 = arith.constant 32 : i32
    %35 = vector.broadcast %c32_i32 : i32 to vector<8x128xi32>
    %36 = arith.cmpi slt, %32, %35 : vector<8x128xi32>
    %37 = arith.andi %34, %36 : vector<8x128xi1>
    %cst_16 = arith.constant 0.000000e+00 : f32
    %38 = vector.broadcast %cst_16 : f32 to vector<8x128xf32>
    %39 = arith.select %37, %27, %38 : vector<8x128xi1>, vector<8x128xf32>
    %40 = vector.shape_cast %39 : vector<8x128xf32> to vector<1x8x128xf32>
    %cst_17 = arith.constant dense<0.000000e+00> : vector<1xf32>
    %41 = vector.multi_reduction <add>, %40, %cst_17 [1, 2] : vector<1x8x128xf32> to vector<1xf32>
    %42 = vector.shape_cast %41 : vector<1xf32> to vector<1x1x1xf32>
    %43 = vector.extract %42[0, 0, 0] : f32 from vector<1x1x1xf32>
    %44 = vector.broadcast %43 : f32 to vector<1x8x128xf32>
    %c0_18 = arith.constant 0 : index
    %c0_19 = arith.constant 0 : index
    %c0_20 = arith.constant 0 : index
    %45 = vector.load %arg8[%c0_18, %c0_19, %c0_20] : memref<1x8x128xf32, #tpu.memory_space<vmem>>, vector<1x8x128xf32>
    tpu.vector_store %arg8[%c0_18, %c0_19, %c0_20], %44 {strides = array<i32>} : memref<1x8x128xf32, #tpu.memory_space<vmem>>, vector<1x8x128xf32>,
    return
  }
  func.func @transform_0(%arg0: i32) -> (i32, i32) {
    %c0_i32 = arith.constant 0 : i32
    %c0_i32_0 = arith.constant 0 : i32
    return %arg0, %c0_i32 : i32, i32
  }
  func.func @transform_1(%arg0: i32) -> (i32, i32) {
    %c0_i32 = arith.constant 0 : i32
    %c0_i32_0 = arith.constant 0 : i32
    %c0_i32_1 = arith.constant 0 : i32
    return %c0_i32, %c0_i32_0 : i32, i32
  }
  func.func @transform_2(%arg0: i32) -> (i32, i32) {
    %c0_i32 = arith.constant 0 : i32
    %c0_i32_0 = arith.constant 0 : i32
    %c0_i32_1 = arith.constant 0 : i32
    return %c0_i32, %c0_i32_0 : i32, i32
  }
  func.func @transform_3(%arg0: i32) -> (i32, i32) {
    %c0_i32 = arith.constant 0 : i32
    %c0_i32_0 = arith.constant 0 : i32
    %c0_i32_1 = arith.constant 0 : i32
    return %c0_i32, %c0_i32_0 : i32, i32
  }
  func.func @transform_4(%arg0: i32) -> (i32, i32) {
    %c0_i32 = arith.constant 0 : i32
    %c0_i32_0 = arith.constant 0 : i32
    %c0_i32_1 = arith.constant 0 : i32
    return %c0_i32, %c0_i32_0 : i32, i32
  }
  func.func @transform_5(%arg0: i32) -> (i32, i32) {
    %c0_i32 = arith.constant 0 : i32
    %c0_i32_0 = arith.constant 0 : i32
    return %arg0, %c0_i32 : i32, i32
  }
  func.func @transform_6(%arg0: i32) -> (i32, i32) {
    %c0_i32 = arith.constant 0 : i32
    %c0_i32_0 = arith.constant 0 : i32
    return %arg0, %c0_i32 : i32, i32
  }
  func.func @transform_7(%arg0: i32) -> (i32, i32, i32) {
    %c0_i32 = arith.constant 0 : i32
    %c0_i32_0 = arith.constant 0 : i32
    %c0_i32_1 = arith.constant 0 : i32
    return %arg0, %c0_i32, %c0_i32_0 : i32, i32, i32
  }
}

</mosaic_0001>

<llo_original>
// kernel: variational_encoder_forward.1
$region0: #{variational_encoder_forward.1}
  #allocation0 [shape = 'u32[]', space=smem, size = 0x4, offset = 0x4, fixed_abs, tag = 'smem constant byte address 0x4 - core index']
  #allocation1 [shape = 'u32[72,128]{1,0:T(1,128)}', space=vmem, size = 0x9000, scoped, tag = 'internal scratch']
  %s0 = inlined_call_operand.vmem [shape: f32[8,784], index: 0, kind: input, shape index: {}]
  %s1 = inlined_call_operand.hbm [shape: bf16[784,512], index: 1, kind: input, shape index: {}]
  %s2 = inlined_call_operand.vmem [shape: f32[1,512], index: 2, kind: input, shape index: {}]
  %s3 = inlined_call_operand.hbm [shape: bf16[512,256], index: 3, kind: input, shape index: {}]
  %s4 = inlined_call_operand.vmem [shape: f32[1,256], index: 4, kind: input, shape index: {}]
  %s5 = inlined_call_operand.vmem [shape: f32[8,128], index: 5, kind: input, shape index: {}]
  %s6 = inlined_call_operand.vmem [shape: f32[8,128], index: 6, kind: output, shape index: {0}]
  %s7 = inlined_call_operand.vmem [shape: f32[1,8,128], index: 7, kind: output, shape index: {1}]
  %8 = xla_tuple %s6, %s7
  %s9 = sld [smem:[#allocation0]]
  $region50: #{variational_encoder_forward.1} parent=0
    _
  %s11 = ssub.s32 1, %s9
  %s12 = scalar_select 0, %s11, %s9
  $region1: #{variational_encoder_forward.1} parent=0
    #allocation2 [shape = 'u8[802816]{0}', space=vmem, size = 0xc4000, scoped, tag = 'input window, operand 1, single buffered']
    #allocation3 [shape = 's32[1]{0}', space=sflag, size = 0x4, scoped, tag = 'scoped memory for variational_encoder_forward.1']
    #allocation4 [shape = 'u8[262144]{0}', space=vmem, size = 0x40000, scoped, tag = 'input window, operand 3, single buffered']
    #allocation5 [shape = 's32[1]{0}', space=sflag, size = 0x4, scoped, tag = 'scoped memory for variational_encoder_forward.1']
    %13 = vsyncpa [#allocation3], 0
    %14 = vsyncpa [#allocation5], 0
    // Predicated region
    $region2: #{variational_encoder_forward.1} parent=1 // pred_check
      _
    $region3: #{variational_encoder_forward.1} parent=1 // pred_check_branch
      %16 = sbr.rel (0) target = $region5
    $region4: #{variational_encoder_forward.1} parent=1 // pred_region
      _
    $region5: #{variational_encoder_forward.1} parent=1 // pred_fallthru
      _
    // Predicated region
    $region6: #{variational_encoder_forward.1} parent=1 // pred_check
      _
    $region7: #{variational_encoder_forward.1} parent=1 // pred_check_branch
      %18 = sbr.rel (0) target = $region9
    $region8: #{variational_encoder_forward.1} parent=1 // pred_region
      %20 = vsyncadd [#allocation3], 0
      %s21 = sshll.u32 %s1, 4
      %s22 = int_to_ptr.hbm [resolvable:$true] %s21
      %s23 = sshll.u32 [#allocation2], 4
      %s24 = int_to_ptr.vmem [resolvable:$true] %s23
      %29 = dma.hbm_to_vmem [thread:$0]  %s22, 25088, %s24, [#allocation3], 256, 256, 16
    $region9: #{variational_encoder_forward.1} parent=1 // pred_fallthru
      _
    // Predicated region
    $region10: #{variational_encoder_forward.1} parent=1 // pred_check
      _
    $region11: #{variational_encoder_forward.1} parent=1 // pred_check_branch
      %31 = sbr.rel (0) target = $region13
    $region12: #{variational_encoder_forward.1} parent=1 // pred_region
      _
    $region13: #{variational_encoder_forward.1} parent=1 // pred_fallthru
      _
    // Predicated region
    $region14: #{variational_encoder_forward.1} parent=1 // pred_check
      _
    $region15: #{variational_encoder_forward.1} parent=1 // pred_check_branch
      %33 = sbr.rel (0) target = $region17
    $region16: #{variational_encoder_forward.1} parent=1 // pred_region
      %35 = vsyncadd [#allocation5], 0
      %s36 = sshll.u32 %s3, 4
      %s37 = int_to_ptr.hbm [resolvable:$true] %s36
      %s38 = sshll.u32 [#allocation4], 4
      %s39 = int_to_ptr.vmem [resolvable:$true] %s38
      %44 = dma.hbm_to_vmem [thread:$0]  %s37, 8192, %s39, [#allocation5], 128, 128, 8
    $region17: #{variational_encoder_forward.1} parent=1 // pred_fallthru
      _
    // Predicated region
    $region18: #{variational_encoder_forward.1} parent=1 // pred_check
      _
    $region19: #{variational_encoder_forward.1} parent=1 // pred_check_branch
      %46 = sbr.rel (0) target = $region21
    $region20: #{variational_encoder_forward.1} parent=1 // pred_region
      _
    $region21: #{variational_encoder_forward.1} parent=1 // pred_fallthru
      _
    // Predicated region
    $region22: #{variational_encoder_forward.1} parent=1 // pred_check
      _
    $region23: #{variational_encoder_forward.1} parent=1 // pred_check_branch
      %48 = sbr.rel (0) target = $region25
    $region24: #{variational_encoder_forward.1} parent=1 // pred_region
      _
    $region25: #{variational_encoder_forward.1} parent=1 // pred_fallthru
      _
    // Predicated region
    $region26: #{variational_encoder_forward.1} parent=1 // pred_check
      _
    $region27: #{variational_encoder_forward.1} parent=1 // pred_check_branch
      %50 = sbr.rel (0) target = $region29
    $region28: #{variational_encoder_forward.1} parent=1 // pred_region
      %52 = dma.done [#allocation3], 25088
    $region29: #{variational_encoder_forward.1} parent=1 // pred_fallthru
      _
    // Predicated region
    $region30: #{variational_encoder_forward.1} parent=1 // pred_check
      _
    $region31: #{variational_encoder_forward.1} parent=1 // pred_check_branch
      %54 = sbr.rel (0) target = $region33
    $region32: #{variational_encoder_forward.1} parent=1 // pred_region
      %56 = dma.done [#allocation5], 8192
    $region33: #{variational_encoder_forward.1} parent=1 // pred_fallthru
      _
    %v58 = vld [vmem:[%s0] sm:$0xff]
    %v59 = vld [vmem:[%s0 + $0x8] sm:$0xff]
    %v60 = vld [vmem:[%s0 + $0x10] sm:$0xff]
    %v61 = vld [vmem:[%s0 + $0x18] sm:$0xff]
    %v62 = vld [vmem:[%s0 + $0x20] sm:$0xff]
    %v63 = vld [vmem:[%s0 + $0x28] sm:$0xff]
    %v64 = vld [vmem:[%s0 + $0x30] sm:$0xff]
    %v65 = vpack.c.bf16 %v58, %v58
    %v66 = vpack.c.bf16 %v59, %v59
    %v67 = vpack.c.bf16 %v60, %v60
    %v68 = vpack.c.bf16 %v61, %v61
    %v69 = vpack.c.bf16 %v62, %v62
    %v70 = vpack.c.bf16 %v63, %v63
    %v71 = vpack.c.bf16 %v64, %v64
    %v72 = vld [vmem:[#allocation2] sm:$0xff]
    %v73 = vld [vmem:[#allocation2 + $0x8] sm:$0xff]
    %v74 = vld [vmem:[#allocation2 + $0x10] sm:$0xff]
    %v75 = vld [vmem:[#allocation2 + $0x18] sm:$0xff]
    %v76 = vld [vmem:[#allocation2 + $0x20] sm:$0xff]
    %v77 = vld [vmem:[#allocation2 + $0x28] sm:$0xff]
    %v78 = vld [vmem:[#allocation2 + $0x30] sm:$0xff]
    %v79 = vld [vmem:[#allocation2 + $0x38] sm:$0xff]
    %v80 = vld [vmem:[#allocation2 + $0x40] sm:$0xff]
    %v81 = vld [vmem:[#allocation2 + $0x48] sm:$0xff]
    %v82 = vld [vmem:[#allocation2 + $0x50] sm:$0xff]
    %v83 = vld [vmem:[#allocation2 + $0x58] sm:$0xff]
    %v84 = vld [vmem:[#allocation2 + $0x60] sm:$0xff]
    %v85 = vld [vmem:[#allocation2 + $0x68] sm:$0xff]
    %v86 = vld [vmem:[#allocation2 + $0x70] sm:$0xff]
    %v87 = vld [vmem:[#allocation2 + $0x78] sm:$0xff]
    %v88 = vld [vmem:[#allocation2 + $0x80] sm:$0xff]
    %v89 = vld [vmem:[#allocation2 + $0x88] sm:$0xff]
    %v90 = vld [vmem:[#allocation2 + $0x90] sm:$0xff]
    %v91 = vld [vmem:[#allocation2 + $0x98] sm:$0xff]
    %v92 = vld [vmem:[#allocation2 + $0xa0] sm:$0xff]
    %v93 = vld [vmem:[#allocation2 + $0xa8] sm:$0xff]
    %v94 = vld [vmem:[#allocation2 + $0xb0] sm:$0xff]
    %v95 = vld [vmem:[#allocation2 + $0xb8] sm:$0xff]
    %v96 = vld [vmem:[#allocation2 + $0xc0] sm:$0xff]
    %v97 = vld [vmem:[#allocation2 + $0xc8] sm:$0xff]
    %v98 = vld [vmem:[#allocation2 + $0xd0] sm:$0xff]
    %v99 = vld [vmem:[#allocation2 + $0xd8] sm:$0xff]
    %v100 = vld [vmem:[#allocation2 + $0xe0] sm:$0xff]
    %v101 = vld [vmem:[#allocation2 + $0xe8] sm:$0xff]
    %v102 = vld [vmem:[#allocation2 + $0xf0] sm:$0xff]
    %v103 = vld [vmem:[#allocation2 + $0xf8] sm:$0xff]
    %v104 = vld [vmem:[#allocation2 + $0x100] sm:$0xff]
    %v105 = vld [vmem:[#allocation2 + $0x108] sm:$0xff]
    %v106 = vld [vmem:[#allocation2 + $0x110] sm:$0xff]
    %v107 = vld [vmem:[#allocation2 + $0x118] sm:$0xff]
    %v108 = vld [vmem:[#allocation2 + $0x120] sm:$0xff]
    %v109 = vld [vmem:[#allocation2 + $0x128] sm:$0xff]
    %v110 = vld [vmem:[#allocation2 + $0x130] sm:$0xff]
    %v111 = vld [vmem:[#allocation2 + $0x138] sm:$0xff]
    %v112 = vld [vmem:[#allocation2 + $0x140] sm:$0xff]
    %v113 = vld [vmem:[#allocation2 + $0x148] sm:$0xff]
    %v114 = vld [vmem:[#allocation2 + $0x150] sm:$0xff]
    %v115 = vld [vmem:[#allocation2 + $0x158] sm:$0xff]
    %v116 = vld [vmem:[#allocation2 + $0x160] sm:$0xff]
    %v117 = vld [vmem:[#allocation2 + $0x168] sm:$0xff]
    %v118 = vld [vmem:[#allocation2 + $0x170] sm:$0xff]
    %v119 = vld [vmem:[#allocation2 + $0x178] sm:$0xff]
    %v120 = vld [vmem:[#allocation2 + $0x180] sm:$0xff]
    %v121 = vld [vmem:[#allocation2 + $0x188] sm:$0xff]
    %v122 = vld [vmem:[#allocation2 + $0x190] sm:$0xff]
    %v123 = vld [vmem:[#allocation2 + $0x198] sm:$0xff]
    %v124 = vld [vmem:[#allocation2 + $0x1a0] sm:$0xff]
    %v125 = vld [vmem:[#allocation2 + $0x1a8] sm:$0xff]
    %v126 = vld [vmem:[#allocation2 + $0x1b0] sm:$0xff]
    %v127 = vld [vmem:[#allocation2 + $0x1b8] sm:$0xff]
    %v128 = vld [vmem:[#allocation2 + $0x1c0] sm:$0xff]
    %v129 = vld [vmem:[#allocation2 + $0x1c8] sm:$0xff]
    %v130 = vld [vmem:[#allocation2 + $0x1d0] sm:$0xff]
    %v131 = vld [vmem:[#allocation2 + $0x1d8] sm:$0xff]
    %v132 = vld [vmem:[#allocation2 + $0x1e0] sm:$0xff]
    %v133 = vld [vmem:[#allocation2 + $0x1e8] sm:$0xff]
    %v134 = vld [vmem:[#allocation2 + $0x1f0] sm:$0xff]
    %v135 = vld [vmem:[#allocation2 + $0x1f8] sm:$0xff]
    %v136 = vld [vmem:[#allocation2 + $0x200] sm:$0xff]
    %v137 = vld [vmem:[#allocation2 + $0x208] sm:$0xff]
    %v138 = vld [vmem:[#allocation2 + $0x210] sm:$0xff]
    %v139 = vld [vmem:[#allocation2 + $0x218] sm:$0xff]
    %v140 = vld [vmem:[#allocation2 + $0x220] sm:$0xff]
    %v141 = vld [vmem:[#allocation2 + $0x228] sm:$0xff]
    %v142 = vld [vmem:[#allocation2 + $0x230] sm:$0xff]
    %v143 = vld [vmem:[#allocation2 + $0x238] sm:$0xff]
    %v144 = vld [vmem:[#allocation2 + $0x240] sm:$0xff]
    %v145 = vld [vmem:[#allocation2 + $0x248] sm:$0xff]
    %v146 = vld [vmem:[#allocation2 + $0x250] sm:$0xff]
    %v147 = vld [vmem:[#allocation2 + $0x258] sm:$0xff]
    %v148 = vld [vmem:[#allocation2 + $0x260] sm:$0xff]
    %v149 = vld [vmem:[#allocation2 + $0x268] sm:$0xff]
    %v150 = vld [vmem:[#allocation2 + $0x270] sm:$0xff]
    %v151 = vld [vmem:[#allocation2 + $0x278] sm:$0xff]
    %v152 = vld [vmem:[#allocation2 + $0x280] sm:$0xff]
    %v153 = vld [vmem:[#allocation2 + $0x288] sm:$0xff]
    %v154 = vld [vmem:[#allocation2 + $0x290] sm:$0xff]
    %v155 = vld [vmem:[#allocation2 + $0x298] sm:$0xff]
    %v156 = vld [vmem:[#allocation2 + $0x2a0] sm:$0xff]
    %v157 = vld [vmem:[#allocation2 + $0x2a8] sm:$0xff]
    %v158 = vld [vmem:[#allocation2 + $0x2b0] sm:$0xff]
    %v159 = vld [vmem:[#allocation2 + $0x2b8] sm:$0xff]
    %v160 = vld [vmem:[#allocation2 + $0x2c0] sm:$0xff]
    %v161 = vld [vmem:[#allocation2 + $0x2c8] sm:$0xff]
    %v162 = vld [vmem:[#allocation2 + $0x2d0] sm:$0xff]
    %v163 = vld [vmem:[#allocation2 + $0x2d8] sm:$0xff]
    %v164 = vld [vmem:[#allocation2 + $0x2e0] sm:$0xff]
    %v165 = vld [vmem:[#allocation2 + $0x2e8] sm:$0xff]
    %v166 = vld [vmem:[#allocation2 + $0x2f0] sm:$0xff]
    %v167 = vld [vmem:[#allocation2 + $0x2f8] sm:$0xff]
    %v168 = vld [vmem:[#allocation2 + $0x300] sm:$0xff]
    %v169 = vld [vmem:[#allocation2 + $0x308] sm:$0xff]
    %v170 = vld [vmem:[#allocation2 + $0x310] sm:$0xff]
    %v171 = vld [vmem:[#allocation2 + $0x318] sm:$0xff]
    %v172 = vld [vmem:[#allocation2 + $0x320] sm:$0xff]
    %v173 = vld [vmem:[#allocation2 + $0x328] sm:$0xff]
    %v174 = vld [vmem:[#allocation2 + $0x330] sm:$0xff]
    %v175 = vld [vmem:[#allocation2 + $0x338] sm:$0xff]
    %v176 = vld [vmem:[#allocation2 + $0x340] sm:$0xff]
    %v177 = vld [vmem:[#allocation2 + $0x348] sm:$0xff]
    %v178 = vld [vmem:[#allocation2 + $0x350] sm:$0xff]
    %v179 = vld [vmem:[#allocation2 + $0x358] sm:$0xff]
    %v180 = vld [vmem:[#allocation2 + $0x360] sm:$0xff]
    %v181 = vld [vmem:[#allocation2 + $0x368] sm:$0xff]
    %v182 = vld [vmem:[#allocation2 + $0x370] sm:$0xff]
    %v183 = vld [vmem:[#allocation2 + $0x378] sm:$0xff]
    %v184 = vld [vmem:[#allocation2 + $0x380] sm:$0xff]
    %v185 = vld [vmem:[#allocation2 + $0x388] sm:$0xff]
    %v186 = vld [vmem:[#allocation2 + $0x390] sm:$0xff]
    %v187 = vld [vmem:[#allocation2 + $0x398] sm:$0xff]
    %v188 = vld [vmem:[#allocation2 + $0x3a0] sm:$0xff]
    %v189 = vld [vmem:[#allocation2 + $0x3a8] sm:$0xff]
    %v190 = vld [vmem:[#allocation2 + $0x3b0] sm:$0xff]
    %v191 = vld [vmem:[#allocation2 + $0x3b8] sm:$0xff]
    %v192 = vld [vmem:[#allocation2 + $0x3c0] sm:$0xff]
    %v193 = vld [vmem:[#allocation2 + $0x3c8] sm:$0xff]
    %v194 = vld [vmem:[#allocation2 + $0x3d0] sm:$0xff]
    %v195 = vld [vmem:[#allocation2 + $0x3d8] sm:$0xff]
    %v196 = vld [vmem:[#allocation2 + $0x3e0] sm:$0xff]
    %v197 = vld [vmem:[#allocation2 + $0x3e8] sm:$0xff]
    %v198 = vld [vmem:[#allocation2 + $0x3f0] sm:$0xff]
    %v199 = vld [vmem:[#allocation2 + $0x3f8] sm:$0xff]
    %v200 = vld [vmem:[#allocation2 + $0x400] sm:$0xff]
    %v201 = vld [vmem:[#allocation2 + $0x408] sm:$0xff]
    %v202 = vld [vmem:[#allocation2 + $0x410] sm:$0xff]
    %v203 = vld [vmem:[#allocation2 + $0x418] sm:$0xff]
    %v204 = vld [vmem:[#allocation2 + $0x420] sm:$0xff]
    %v205 = vld [vmem:[#allocation2 + $0x428] sm:$0xff]
    %v206 = vld [vmem:[#allocation2 + $0x430] sm:$0xff]
    %v207 = vld [vmem:[#allocation2 + $0x438] sm:$0xff]
    %v208 = vld [vmem:[#allocation2 + $0x440] sm:$0xff]
    %v209 = vld [vmem:[#allocation2 + $0x448] sm:$0xff]
    %v210 = vld [vmem:[#allocation2 + $0x450] sm:$0xff]
    %v211 = vld [vmem:[#allocation2 + $0x458] sm:$0xff]
    %v212 = vld [vmem:[#allocation2 + $0x460] sm:$0xff]
    %v213 = vld [vmem:[#allocation2 + $0x468] sm:$0xff]
    %v214 = vld [vmem:[#allocation2 + $0x470] sm:$0xff]
    %v215 = vld [vmem:[#allocation2 + $0x478] sm:$0xff]
    %v216 = vld [vmem:[#allocation2 + $0x480] sm:$0xff]
    %v217 = vld [vmem:[#allocation2 + $0x488] sm:$0xff]
    %v218 = vld [vmem:[#allocation2 + $0x490] sm:$0xff]
    %v219 = vld [vmem:[#allocation2 + $0x498] sm:$0xff]
    %v220 = vld [vmem:[#allocation2 + $0x4a0] sm:$0xff]
    %v221 = vld [vmem:[#allocation2 + $0x4a8] sm:$0xff]
    %v222 = vld [vmem:[#allocation2 + $0x4b0] sm:$0xff]
    %v223 = vld [vmem:[#allocation2 + $0x4b8] sm:$0xff]
    %v224 = vld [vmem:[#allocation2 + $0x4c0] sm:$0xff]
    %v225 = vld [vmem:[#allocation2 + $0x4c8] sm:$0xff]
    %v226 = vld [vmem:[#allocation2 + $0x4d0] sm:$0xff]
    %v227 = vld [vmem:[#allocation2 + $0x4d8] sm:$0xff]
    %v228 = vld [vmem:[#allocation2 + $0x4e0] sm:$0xff]
    %v229 = vld [vmem:[#allocation2 + $0x4e8] sm:$0xff]
    %v230 = vld [vmem:[#allocation2 + $0x4f0] sm:$0xff]
    %v231 = vld [vmem:[#allocation2 + $0x4f8] sm:$0xff]
    %v232 = vld [vmem:[#allocation2 + $0x500] sm:$0xff]
    %v233 = vld [vmem:[#allocation2 + $0x508] sm:$0xff]
    %v234 = vld [vmem:[#allocation2 + $0x510] sm:$0xff]
    %v235 = vld [vmem:[#allocation2 + $0x518] sm:$0xff]
    %v236 = vld [vmem:[#allocation2 + $0x520] sm:$0xff]
    %v237 = vld [vmem:[#allocation2 + $0x528] sm:$0xff]
    %v238 = vld [vmem:[#allocation2 + $0x530] sm:$0xff]
    %v239 = vld [vmem:[#allocation2 + $0x538] sm:$0xff]
    %v240 = vld [vmem:[#allocation2 + $0x540] sm:$0xff]
    %v241 = vld [vmem:[#allocation2 + $0x548] sm:$0xff]
    %v242 = vld [vmem:[#allocation2 + $0x550] sm:$0xff]
    %v243 = vld [vmem:[#allocation2 + $0x558] sm:$0xff]
    %v244 = vld [vmem:[#allocation2 + $0x560] sm:$0xff]
    %v245 = vld [vmem:[#allocation2 + $0x568] sm:$0xff]
    %v246 = vld [vmem:[#allocation2 + $0x570] sm:$0xff]
    %v247 = vld [vmem:[#allocation2 + $0x578] sm:$0xff]
    %v248 = vld [vmem:[#allocation2 + $0x580] sm:$0xff]
    %v249 = vld [vmem:[#allocation2 + $0x588] sm:$0xff]
    %v250 = vld [vmem:[#allocation2 + $0x590] sm:$0xff]
    %v251 = vld [vmem:[#allocation2 + $0x598] sm:$0xff]
    %v252 = vld [vmem:[#allocation2 + $0x5a0] sm:$0xff]
    %v253 = vld [vmem:[#allocation2 + $0x5a8] sm:$0xff]
    %v254 = vld [vmem:[#allocation2 + $0x5b0] sm:$0xff]
    %v255 = vld [vmem:[#allocation2 + $0x5b8] sm:$0xff]
    %v256 = vld [vmem:[#allocation2 + $0x5c0] sm:$0xff]
    %v257 = vld [vmem:[#allocation2 + $0x5c8] sm:$0xff]
    %v258 = vld [vmem:[#allocation2 + $0x5d0] sm:$0xff]
    %v259 = vld [vmem:[#allocation2 + $0x5d8] sm:$0xff]
    %v260 = vld [vmem:[#allocation2 + $0x5e0] sm:$0xff]
    %v261 = vld [vmem:[#allocation2 + $0x5e8] sm:$0xff]
    %v262 = vld [vmem:[#allocation2 + $0x5f0] sm:$0xff]
    %v263 = vld [vmem:[#allocation2 + $0x5f8] sm:$0xff]
    %v264 = vld [vmem:[#allocation2 + $0x600] sm:$0xff]
    %v265 = vld [vmem:[#allocation2 + $0x608] sm:$0xff]
    %v266 = vld [vmem:[#allocation2 + $0x610] sm:$0xff]
    %v267 = vld [vmem:[#allocation2 + $0x618] sm:$0xff]
    %v268 = vld [vmem:[%s2] sm:$0xf]
    %v270 = vperm.slane %v268, 0
    %v271 = vperm.slane %v268, 1
    %v272 = vperm.slane %v268, 2
    %v273 = vperm.slane %v268, 3
    %v474 = vunpack.c.l.b16 %v72
    %v475 = vunpack.c.h.b16 %v72
    %v476 = vunpack.c.l.b16 %v73
    %v477 = vunpack.c.h.b16 %v73
    %v478 = vunpack.c.l.b16 %v74
    %v479 = vunpack.c.h.b16 %v74
    %v480 = vunpack.c.l.b16 %v75
    %v481 = vunpack.c.h.b16 %v75
    %v482 = vunpack.c.l.b16 %v76
    %v483 = vunpack.c.h.b16 %v76
    %v484 = vunpack.c.l.b16 %v77
    %v485 = vunpack.c.h.b16 %v77
    %v486 = vunpack.c.l.b16 %v78
    %v487 = vunpack.c.h.b16 %v78
    %v488 = vunpack.c.l.b16 %v79
    %v489 = vunpack.c.h.b16 %v79
    %v490 = vunpack.c.l.b16 %v80
    %v491 = vunpack.c.h.b16 %v80
    %v492 = vunpack.c.l.b16 %v81
    %v493 = vunpack.c.h.b16 %v81
    %v494 = vunpack.c.l.b16 %v82
    %v495 = vunpack.c.h.b16 %v82
    %v496 = vunpack.c.l.b16 %v83
    %v497 = vunpack.c.h.b16 %v83
    %v498 = vunpack.c.l.b16 %v84
    %v499 = vunpack.c.h.b16 %v84
    %v500 = vunpack.c.l.b16 %v85
    %v501 = vunpack.c.h.b16 %v85
    %v502 = vunpack.c.l.b16 %v86
    %v503 = vunpack.c.h.b16 %v86
    %v504 = vunpack.c.l.b16 %v87
    %v505 = vunpack.c.h.b16 %v87
    %v506 = vunpack.c.l.b16 %v88
    %v507 = vunpack.c.h.b16 %v88
    %v508 = vunpack.c.l.b16 %v89
    %v509 = vunpack.c.h.b16 %v89
    %v510 = vunpack.c.l.b16 %v90
    %v511 = vunpack.c.h.b16 %v90
    %v512 = vunpack.c.l.b16 %v91
    %v513 = vunpack.c.h.b16 %v91
    %v514 = vunpack.c.l.b16 %v92
    %v515 = vunpack.c.h.b16 %v92
    %v516 = vunpack.c.l.b16 %v93
    %v517 = vunpack.c.h.b16 %v93
    %v518 = vunpack.c.l.b16 %v94
    %v519 = vunpack.c.h.b16 %v94
    %v520 = vunpack.c.l.b16 %v95
    %v521 = vunpack.c.h.b16 %v95
    %v522 = vunpack.c.l.b16 %v96
    %v523 = vunpack.c.h.b16 %v96
    %v524 = vunpack.c.l.b16 %v97
    %v525 = vunpack.c.h.b16 %v97
    %v526 = vunpack.c.l.b16 %v98
    %v527 = vunpack.c.h.b16 %v98
    %v528 = vunpack.c.l.b16 %v99
    %v529 = vunpack.c.h.b16 %v99
    %v530 = vunpack.c.l.b16 %v100
    %v531 = vunpack.c.h.b16 %v100
    %v532 = vunpack.c.l.b16 %v101
    %v533 = vunpack.c.h.b16 %v101
    %v534 = vunpack.c.l.b16 %v102
    %v535 = vunpack.c.h.b16 %v102
    %v536 = vunpack.c.l.b16 %v103
    %v537 = vunpack.c.h.b16 %v103
    %v538 = vunpack.c.l.b16 %v104
    %v539 = vunpack.c.h.b16 %v104
    %v540 = vunpack.c.l.b16 %v105
    %v541 = vunpack.c.h.b16 %v105
    %v542 = vunpack.c.l.b16 %v106
    %v543 = vunpack.c.h.b16 %v106
    %v544 = vunpack.c.l.b16 %v107
    %v545 = vunpack.c.h.b16 %v107
    %v546 = vunpack.c.l.b16 %v108
    %v547 = vunpack.c.h.b16 %v108
    %v548 = vunpack.c.l.b16 %v109
    %v549 = vunpack.c.h.b16 %v109
    %v550 = vunpack.c.l.b16 %v110
    %v551 = vunpack.c.h.b16 %v110
    %v552 = vunpack.c.l.b16 %v111
    %v553 = vunpack.c.h.b16 %v111
    %v554 = vunpack.c.l.b16 %v112
    %v555 = vunpack.c.h.b16 %v112
    %v556 = vunpack.c.l.b16 %v113
    %v557 = vunpack.c.h.b16 %v113
    %v558 = vunpack.c.l.b16 %v114
    %v559 = vunpack.c.h.b16 %v114
    %v560 = vunpack.c.l.b16 %v115
    %v561 = vunpack.c.h.b16 %v115
    %v562 = vunpack.c.l.b16 %v116
    %v563 = vunpack.c.h.b16 %v116
    %v564 = vunpack.c.l.b16 %v117
    %v565 = vunpack.c.h.b16 %v117
    %v566 = vunpack.c.l.b16 %v118
    %v567 = vunpack.c.h.b16 %v118
    %v568 = vunpack.c.l.b16 %v119
    %v569 = vunpack.c.h.b16 %v119
    %v570 = vunpack.c.l.b16 %v120
    %v571 = vunpack.c.h.b16 %v120
    %v572 = vunpack.c.l.b16 %v121
    %v573 = vunpack.c.h.b16 %v121
    %v574 = vunpack.c.l.b16 %v122
    %v575 = vunpack.c.h.b16 %v122
    %v576 = vunpack.c.l.b16 %v123
    %v577 = vunpack.c.h.b16 %v123
    %v578 = vunpack.c.l.b16 %v124
    %v579 = vunpack.c.h.b16 %v124
    %v580 = vunpack.c.l.b16 %v125
    %v581 = vunpack.c.h.b16 %v125
    %v582 = vunpack.c.l.b16 %v126
    %v583 = vunpack.c.h.b16 %v126
    %v584 = vunpack.c.l.b16 %v127
    %v585 = vunpack.c.h.b16 %v127
    %v586 = vunpack.c.l.b16 %v128
    %v587 = vunpack.c.h.b16 %v128
    %v588 = vunpack.c.l.b16 %v129
    %v589 = vunpack.c.h.b16 %v129
    %v590 = vunpack.c.l.b16 %v130
    %v591 = vunpack.c.h.b16 %v130
    %v592 = vunpack.c.l.b16 %v131
    %v593 = vunpack.c.h.b16 %v131
    %v594 = vunpack.c.l.b16 %v132
    %v595 = vunpack.c.h.b16 %v132
    %v596 = vunpack.c.l.b16 %v133
    %v597 = vunpack.c.h.b16 %v133
    %v598 = vunpack.c.l.b16 %v134
    %v599 = vunpack.c.h.b16 %v134
    %v600 = vunpack.c.l.b16 %v135
    %v601 = vunpack.c.h.b16 %v135
    %v602 = vunpack.c.l.b16 %v136
    %v603 = vunpack.c.h.b16 %v136
    %v604 = vunpack.c.l.b16 %v137
    %v605 = vunpack.c.h.b16 %v137
    %v606 = vunpack.c.l.b16 %v138
    %v607 = vunpack.c.h.b16 %v138
    %v608 = vunpack.c.l.b16 %v139
    %v609 = vunpack.c.h.b16 %v139
    %v610 = vunpack.c.l.b16 %v140
    %v611 = vunpack.c.h.b16 %v140
    %v612 = vunpack.c.l.b16 %v141
    %v613 = vunpack.c.h.b16 %v141
    %v614 = vunpack.c.l.b16 %v142
    %v615 = vunpack.c.h.b16 %v142
    %v616 = vunpack.c.l.b16 %v143
    %v617 = vunpack.c.h.b16 %v143
    %v618 = vunpack.c.l.b16 %v144
    %v619 = vunpack.c.h.b16 %v144
    %v620 = vunpack.c.l.b16 %v145
    %v621 = vunpack.c.h.b16 %v145
    %v622 = vunpack.c.l.b16 %v146
    %v623 = vunpack.c.h.b16 %v146
    %v624 = vunpack.c.l.b16 %v147
    %v625 = vunpack.c.h.b16 %v147
    %v626 = vunpack.c.l.b16 %v148
    %v627 = vunpack.c.h.b16 %v148
    %v628 = vunpack.c.l.b16 %v149
    %v629 = vunpack.c.h.b16 %v149
    %v630 = vunpack.c.l.b16 %v150
    %v631 = vunpack.c.h.b16 %v150
    %v632 = vunpack.c.l.b16 %v151
    %v633 = vunpack.c.h.b16 %v151
    %v634 = vunpack.c.l.b16 %v152
    %v635 = vunpack.c.h.b16 %v152
    %v636 = vunpack.c.l.b16 %v153
    %v637 = vunpack.c.h.b16 %v153
    %v638 = vunpack.c.l.b16 %v154
    %v639 = vunpack.c.h.b16 %v154
    %v640 = vunpack.c.l.b16 %v155
    %v641 = vunpack.c.h.b16 %v155
    %v642 = vunpack.c.l.b16 %v156
    %v643 = vunpack.c.h.b16 %v156
    %v644 = vunpack.c.l.b16 %v157
    %v645 = vunpack.c.h.b16 %v157
    %v646 = vunpack.c.l.b16 %v158
    %v647 = vunpack.c.h.b16 %v158
    %v648 = vunpack.c.l.b16 %v159
    %v649 = vunpack.c.h.b16 %v159
    %v650 = vunpack.c.l.b16 %v160
    %v651 = vunpack.c.h.b16 %v160
    %v652 = vunpack.c.l.b16 %v161
    %v653 = vunpack.c.h.b16 %v161
    %v654 = vunpack.c.l.b16 %v162
    %v655 = vunpack.c.h.b16 %v162
    %v656 = vunpack.c.l.b16 %v163
    %v657 = vunpack.c.h.b16 %v163
    %v658 = vunpack.c.l.b16 %v164
    %v659 = vunpack.c.h.b16 %v164
    %v660 = vunpack.c.l.b16 %v165
    %v661 = vunpack.c.h.b16 %v165
    %v662 = vunpack.c.l.b16 %v166
    %v663 = vunpack.c.h.b16 %v166
    %v664 = vunpack.c.l.b16 %v167
    %v665 = vunpack.c.h.b16 %v167
    %v666 = vunpack.c.l.b16 %v168
    %v667 = vunpack.c.h.b16 %v168
    %v668 = vunpack.c.l.b16 %v169
    %v669 = vunpack.c.h.b16 %v169
    %v670 = vunpack.c.l.b16 %v170
    %v671 = vunpack.c.h.b16 %v170
    %v672 = vunpack.c.l.b16 %v171
    %v673 = vunpack.c.h.b16 %v171
    %v674 = vunpack.c.l.b16 %v172
    %v675 = vunpack.c.h.b16 %v172
    %v676 = vunpack.c.l.b16 %v173
    %v677 = vunpack.c.h.b16 %v173
    %v678 = vunpack.c.l.b16 %v174
    %v679 = vunpack.c.h.b16 %v174
    %v680 = vunpack.c.l.b16 %v175
    %v681 = vunpack.c.h.b16 %v175
    %v682 = vunpack.c.l.b16 %v176
    %v683 = vunpack.c.h.b16 %v176
    %v684 = vunpack.c.l.b16 %v177
    %v685 = vunpack.c.h.b16 %v177
    %v686 = vunpack.c.l.b16 %v178
    %v687 = vunpack.c.h.b16 %v178
    %v688 = vunpack.c.l.b16 %v179
    %v689 = vunpack.c.h.b16 %v179
    %v690 = vunpack.c.l.b16 %v180
    %v691 = vunpack.c.h.b16 %v180
    %v692 = vunpack.c.l.b16 %v181
    %v693 = vunpack.c.h.b16 %v181
    %v694 = vunpack.c.l.b16 %v182
    %v695 = vunpack.c.h.b16 %v182
    %v696 = vunpack.c.l.b16 %v183
    %v697 = vunpack.c.h.b16 %v183
    %v698 = vunpack.c.l.b16 %v184
    %v699 = vunpack.c.h.b16 %v184
    %v700 = vunpack.c.l.b16 %v185
    %v701 = vunpack.c.h.b16 %v185
    %v702 = vunpack.c.l.b16 %v186
    %v703 = vunpack.c.h.b16 %v186
    %v704 = vunpack.c.l.b16 %v187
    %v705 = vunpack.c.h.b16 %v187
    %v706 = vunpack.c.l.b16 %v188
    %v707 = vunpack.c.h.b16 %v188
    %v708 = vunpack.c.l.b16 %v189
    %v709 = vunpack.c.h.b16 %v189
    %v710 = vunpack.c.l.b16 %v190
    %v711 = vunpack.c.h.b16 %v190
    %v712 = vunpack.c.l.b16 %v191
    %v713 = vunpack.c.h.b16 %v191
    %v714 = vunpack.c.l.b16 %v192
    %v715 = vunpack.c.h.b16 %v192
    %v716 = vunpack.c.l.b16 %v193
    %v717 = vunpack.c.h.b16 %v193
    %v718 = vunpack.c.l.b16 %v194
    %v719 = vunpack.c.h.b16 %v194
    %v720 = vunpack.c.l.b16 %v195
    %v721 = vunpack.c.h.b16 %v195
    %v722 = vunpack.c.l.b16 %v196
    %v723 = vunpack.c.h.b16 %v196
    %v724 = vunpack.c.l.b16 %v197
    %v725 = vunpack.c.h.b16 %v197
    %v726 = vunpack.c.l.b16 %v198
    %v727 = vunpack.c.h.b16 %v198
    %v728 = vunpack.c.l.b16 %v199
    %v729 = vunpack.c.h.b16 %v199
    %v730 = vunpack.c.l.b16 %v200
    %v731 = vunpack.c.h.b16 %v200
    %v732 = vunpack.c.l.b16 %v201
    %v733 = vunpack.c.h.b16 %v201
    %v734 = vunpack.c.l.b16 %v202
    %v735 = vunpack.c.h.b16 %v202
    %v736 = vunpack.c.l.b16 %v203
    %v737 = vunpack.c.h.b16 %v203
    %v738 = vunpack.c.l.b16 %v204
    %v739 = vunpack.c.h.b16 %v204
    %v740 = vunpack.c.l.b16 %v205
    %v741 = vunpack.c.h.b16 %v205
    %v742 = vunpack.c.l.b16 %v206
    %v743 = vunpack.c.h.b16 %v206
    %v744 = vunpack.c.l.b16 %v207
    %v745 = vunpack.c.h.b16 %v207
    %v746 = vunpack.c.l.b16 %v208
    %v747 = vunpack.c.h.b16 %v208
    %v748 = vunpack.c.l.b16 %v209
    %v749 = vunpack.c.h.b16 %v209
    %v750 = vunpack.c.l.b16 %v210
    %v751 = vunpack.c.h.b16 %v210
    %v752 = vunpack.c.l.b16 %v211
    %v753 = vunpack.c.h.b16 %v211
    %v754 = vunpack.c.l.b16 %v212
    %v755 = vunpack.c.h.b16 %v212
    %v756 = vunpack.c.l.b16 %v213
    %v757 = vunpack.c.h.b16 %v213
    %v758 = vunpack.c.l.b16 %v214
    %v759 = vunpack.c.h.b16 %v214
    %v760 = vunpack.c.l.b16 %v215
    %v761 = vunpack.c.h.b16 %v215
    %v762 = vunpack.c.l.b16 %v216
    %v763 = vunpack.c.h.b16 %v216
    %v764 = vunpack.c.l.b16 %v217
    %v765 = vunpack.c.h.b16 %v217
    %v766 = vunpack.c.l.b16 %v218
    %v767 = vunpack.c.h.b16 %v218
    %v768 = vunpack.c.l.b16 %v219
    %v769 = vunpack.c.h.b16 %v219
    %v770 = vunpack.c.l.b16 %v220
    %v771 = vunpack.c.h.b16 %v220
    %v772 = vunpack.c.l.b16 %v221
    %v773 = vunpack.c.h.b16 %v221
    %v774 = vunpack.c.l.b16 %v222
    %v775 = vunpack.c.h.b16 %v222
    %v776 = vunpack.c.l.b16 %v223
    %v777 = vunpack.c.h.b16 %v223
    %v778 = vunpack.c.l.b16 %v224
    %v779 = vunpack.c.h.b16 %v224
    %v780 = vunpack.c.l.b16 %v225
    %v781 = vunpack.c.h.b16 %v225
    %v782 = vunpack.c.l.b16 %v226
    %v783 = vunpack.c.h.b16 %v226
    %v784 = vunpack.c.l.b16 %v227
    %v785 = vunpack.c.h.b16 %v227
    %v786 = vunpack.c.l.b16 %v228
    %v787 = vunpack.c.h.b16 %v228
    %v788 = vunpack.c.l.b16 %v229
    %v789 = vunpack.c.h.b16 %v229
    %v790 = vunpack.c.l.b16 %v230
    %v791 = vunpack.c.h.b16 %v230
    %v792 = vunpack.c.l.b16 %v231
    %v793 = vunpack.c.h.b16 %v231
    %v794 = vunpack.c.l.b16 %v232
    %v795 = vunpack.c.h.b16 %v232
    %v796 = vunpack.c.l.b16 %v233
    %v797 = vunpack.c.h.b16 %v233
    %v798 = vunpack.c.l.b16 %v234
    %v799 = vunpack.c.h.b16 %v234
    %v800 = vunpack.c.l.b16 %v235
    %v801 = vunpack.c.h.b16 %v235
    %v802 = vunpack.c.l.b16 %v236
    %v803 = vunpack.c.h.b16 %v236
    %v804 = vunpack.c.l.b16 %v237
    %v805 = vunpack.c.h.b16 %v237
    %v806 = vunpack.c.l.b16 %v238
    %v807 = vunpack.c.h.b16 %v238
    %v808 = vunpack.c.l.b16 %v239
    %v809 = vunpack.c.h.b16 %v239
    %v810 = vunpack.c.l.b16 %v240
    %v811 = vunpack.c.h.b16 %v240
    %v812 = vunpack.c.l.b16 %v241
    %v813 = vunpack.c.h.b16 %v241
    %v814 = vunpack.c.l.b16 %v242
    %v815 = vunpack.c.h.b16 %v242
    %v816 = vunpack.c.l.b16 %v243
    %v817 = vunpack.c.h.b16 %v243
    %v818 = vunpack.c.l.b16 %v244
    %v819 = vunpack.c.h.b16 %v244
    %v820 = vunpack.c.l.b16 %v245
    %v821 = vunpack.c.h.b16 %v245
    %v822 = vunpack.c.l.b16 %v246
    %v823 = vunpack.c.h.b16 %v246
    %v824 = vunpack.c.l.b16 %v247
    %v825 = vunpack.c.h.b16 %v247
    %v826 = vunpack.c.l.b16 %v248
    %v827 = vunpack.c.h.b16 %v248
    %v828 = vunpack.c.l.b16 %v249
    %v829 = vunpack.c.h.b16 %v249
    %v830 = vunpack.c.l.b16 %v250
    %v831 = vunpack.c.h.b16 %v250
    %v832 = vunpack.c.l.b16 %v251
    %v833 = vunpack.c.h.b16 %v251
    %v834 = vunpack.c.l.b16 %v252
    %v835 = vunpack.c.h.b16 %v252
    %v836 = vunpack.c.l.b16 %v253
    %v837 = vunpack.c.h.b16 %v253
    %v838 = vunpack.c.l.b16 %v254
    %v839 = vunpack.c.h.b16 %v254
    %v840 = vunpack.c.l.b16 %v255
    %v841 = vunpack.c.h.b16 %v255
    %v842 = vunpack.c.l.b16 %v256
    %v843 = vunpack.c.h.b16 %v256
    %v844 = vunpack.c.l.b16 %v257
    %v845 = vunpack.c.h.b16 %v257
    %v846 = vunpack.c.l.b16 %v258
    %v847 = vunpack.c.h.b16 %v258
    %v848 = vunpack.c.l.b16 %v259
    %v849 = vunpack.c.h.b16 %v259
    %v850 = vunpack.c.l.b16 %v260
    %v851 = vunpack.c.h.b16 %v260
    %v852 = vunpack.c.l.b16 %v261
    %v853 = vunpack.c.h.b16 %v261
    %v854 = vunpack.c.l.b16 %v262
    %v855 = vunpack.c.h.b16 %v262
    %v856 = vunpack.c.l.b16 %v263
    %v857 = vunpack.c.h.b16 %v263
    %v858 = vunpack.c.l.b16 %v264
    %v859 = vunpack.c.h.b16 %v264
    %v860 = vunpack.c.l.b16 %v265
    %v861 = vunpack.c.h.b16 %v265
    %v862 = vunpack.c.l.b16 %v266
    %v863 = vunpack.c.h.b16 %v266
    %v864 = vunpack.c.l.b16 %v267
    %v865 = vunpack.c.h.b16 %v267
    %v866 = vpack.c.b16 %v478, %v474
    %v867 = vpack.c.b16 %v479, %v475
    %v868 = vpack.c.b16 %v480, %v476
    %v869 = vpack.c.b16 %v481, %v477
    %v870 = vpack.c.b16 %v486, %v482
    %v871 = vpack.c.b16 %v487, %v483
    %v872 = vpack.c.b16 %v488, %v484
    %v873 = vpack.c.b16 %v489, %v485
    %v874 = vpack.c.b16 %v494, %v490
    %v875 = vpack.c.b16 %v495, %v491
    %v876 = vpack.c.b16 %v496, %v492
    %v877 = vpack.c.b16 %v497, %v493
    %v878 = vpack.c.b16 %v502, %v498
    %v879 = vpack.c.b16 %v503, %v499
    %v880 = vpack.c.b16 %v504, %v500
    %v881 = vpack.c.b16 %v505, %v501
    %v882 = vpack.c.b16 %v510, %v506
    %v883 = vpack.c.b16 %v511, %v507
    %v884 = vpack.c.b16 %v512, %v508
    %v885 = vpack.c.b16 %v513, %v509
    %v886 = vpack.c.b16 %v518, %v514
    %v887 = vpack.c.b16 %v519, %v515
    %v888 = vpack.c.b16 %v520, %v516
    %v889 = vpack.c.b16 %v521, %v517
    %v890 = vpack.c.b16 %v526, %v522
    %v891 = vpack.c.b16 %v527, %v523
    %v892 = vpack.c.b16 %v528, %v524
    %v893 = vpack.c.b16 %v529, %v525
    %v894 = vpack.c.b16 %v534, %v530
    %v895 = vpack.c.b16 %v535, %v531
    %v896 = vpack.c.b16 %v536, %v532
    %v897 = vpack.c.b16 %v537, %v533
    %v898 = vpack.c.b16 %v542, %v538
    %v899 = vpack.c.b16 %v543, %v539
    %v900 = vpack.c.b16 %v544, %v540
    %v901 = vpack.c.b16 %v545, %v541
    %v902 = vpack.c.b16 %v550, %v546
    %v903 = vpack.c.b16 %v551, %v547
    %v904 = vpack.c.b16 %v552, %v548
    %v905 = vpack.c.b16 %v553, %v549
    %v906 = vpack.c.b16 %v558, %v554
    %v907 = vpack.c.b16 %v559, %v555
    %v908 = vpack.c.b16 %v560, %v556
    %v909 = vpack.c.b16 %v561, %v557
    %v910 = vpack.c.b16 %v566, %v562
    %v911 = vpack.c.b16 %v567, %v563
    %v912 = vpack.c.b16 %v568, %v564
    %v913 = vpack.c.b16 %v569, %v565
    %v914 = vpack.c.b16 %v574, %v570
    %v915 = vpack.c.b16 %v575, %v571
    %v916 = vpack.c.b16 %v576, %v572
    %v917 = vpack.c.b16 %v577, %v573
    %v918 = vpack.c.b16 %v582, %v578
    %v919 = vpack.c.b16 %v583, %v579
    %v920 = vpack.c.b16 %v584, %v580
    %v921 = vpack.c.b16 %v585, %v581
    %v922 = vpack.c.b16 %v590, %v586
    %v923 = vpack.c.b16 %v591, %v587
    %v924 = vpack.c.b16 %v592, %v588
    %v925 = vpack.c.b16 %v593, %v589
    %v926 = vpack.c.b16 %v598, %v594
    %v927 = vpack.c.b16 %v599, %v595
    %v928 = vpack.c.b16 %v600, %v596
    %v929 = vpack.c.b16 %v601, %v597
    %v930 = vpack.c.b16 %v606, %v602
    %v931 = vpack.c.b16 %v607, %v603
    %v932 = vpack.c.b16 %v608, %v604
    %v933 = vpack.c.b16 %v609, %v605
    %v934 = vpack.c.b16 %v614, %v610
    %v935 = vpack.c.b16 %v615, %v611
    %v936 = vpack.c.b16 %v616, %v612
    %v937 = vpack.c.b16 %v617, %v613
    %v938 = vpack.c.b16 %v622, %v618
    %v939 = vpack.c.b16 %v623, %v619
    %v940 = vpack.c.b16 %v624, %v620
    %v941 = vpack.c.b16 %v625, %v621
    %v942 = vpack.c.b16 %v630, %v626
    %v943 = vpack.c.b16 %v631, %v627
    %v944 = vpack.c.b16 %v632, %v628
    %v945 = vpack.c.b16 %v633, %v629
    %v946 = vpack.c.b16 %v638, %v634
    %v947 = vpack.c.b16 %v639, %v635
    %v948 = vpack.c.b16 %v640, %v636
    %v949 = vpack.c.b16 %v641, %v637
    %v950 = vpack.c.b16 %v646, %v642
    %v951 = vpack.c.b16 %v647, %v643
    %v952 = vpack.c.b16 %v648, %v644
    %v953 = vpack.c.b16 %v649, %v645
    %v954 = vpack.c.b16 %v654, %v650
    %v955 = vpack.c.b16 %v655, %v651
    %v956 = vpack.c.b16 %v656, %v652
    %v957 = vpack.c.b16 %v657, %v653
    %v958 = vpack.c.b16 %v662, %v658
    %v959 = vpack.c.b16 %v663, %v659
    %v960 = vpack.c.b16 %v664, %v660
    %v961 = vpack.c.b16 %v665, %v661
    %v962 = vpack.c.b16 %v670, %v666
    %v963 = vpack.c.b16 %v671, %v667
    %v964 = vpack.c.b16 %v672, %v668
    %v965 = vpack.c.b16 %v673, %v669
    %v966 = vpack.c.b16 %v678, %v674
    %v967 = vpack.c.b16 %v679, %v675
    %v968 = vpack.c.b16 %v680, %v676
    %v969 = vpack.c.b16 %v681, %v677
    %v970 = vpack.c.b16 %v686, %v682
    %v971 = vpack.c.b16 %v687, %v683
    %v972 = vpack.c.b16 %v688, %v684
    %v973 = vpack.c.b16 %v689, %v685
    %v974 = vpack.c.b16 %v694, %v690
    %v975 = vpack.c.b16 %v695, %v691
    %v976 = vpack.c.b16 %v696, %v692
    %v977 = vpack.c.b16 %v697, %v693
    %v978 = vpack.c.b16 %v702, %v698
    %v979 = vpack.c.b16 %v703, %v699
    %v980 = vpack.c.b16 %v704, %v700
    %v981 = vpack.c.b16 %v705, %v701
    %v982 = vpack.c.b16 %v710, %v706
    %v983 = vpack.c.b16 %v711, %v707
    %v984 = vpack.c.b16 %v712, %v708
    %v985 = vpack.c.b16 %v713, %v709
    %v986 = vpack.c.b16 %v718, %v714
    %v987 = vpack.c.b16 %v719, %v715
    %v988 = vpack.c.b16 %v720, %v716
    %v989 = vpack.c.b16 %v721, %v717
    %v990 = vpack.c.b16 %v726, %v722
    %v991 = vpack.c.b16 %v727, %v723
    %v992 = vpack.c.b16 %v728, %v724
    %v993 = vpack.c.b16 %v729, %v725
    %v994 = vpack.c.b16 %v734, %v730
    %v995 = vpack.c.b16 %v735, %v731
    %v996 = vpack.c.b16 %v736, %v732
    %v997 = vpack.c.b16 %v737, %v733
    %v998 = vpack.c.b16 %v742, %v738
    %v999 = vpack.c.b16 %v743, %v739
    %v1000 = vpack.c.b16 %v744, %v740
    %v1001 = vpack.c.b16 %v745, %v741
    %v1002 = vpack.c.b16 %v750, %v746
    %v1003 = vpack.c.b16 %v751, %v747
    %v1004 = vpack.c.b16 %v752, %v748
    %v1005 = vpack.c.b16 %v753, %v749
    %v1006 = vpack.c.b16 %v758, %v754
    %v1007 = vpack.c.b16 %v759, %v755
    %v1008 = vpack.c.b16 %v760, %v756
    %v1009 = vpack.c.b16 %v761, %v757
    %v1010 = vpack.c.b16 %v766, %v762
    %v1011 = vpack.c.b16 %v767, %v763
    %v1012 = vpack.c.b16 %v768, %v764
    %v1013 = vpack.c.b16 %v769, %v765
    %v1014 = vpack.c.b16 %v774, %v770
    %v1015 = vpack.c.b16 %v775, %v771
    %v1016 = vpack.c.b16 %v776, %v772
    %v1017 = vpack.c.b16 %v777, %v773
    %v1018 = vpack.c.b16 %v782, %v778
    %v1019 = vpack.c.b16 %v783, %v779
    %v1020 = vpack.c.b16 %v784, %v780
    %v1021 = vpack.c.b16 %v785, %v781
    %v1022 = vpack.c.b16 %v790, %v786
    %v1023 = vpack.c.b16 %v791, %v787
    %v1024 = vpack.c.b16 %v792, %v788
    %v1025 = vpack.c.b16 %v793, %v789
    %v1026 = vpack.c.b16 %v798, %v794
    %v1027 = vpack.c.b16 %v799, %v795
    %v1028 = vpack.c.b16 %v800, %v796
    %v1029 = vpack.c.b16 %v801, %v797
    %v1030 = vpack.c.b16 %v806, %v802
    %v1031 = vpack.c.b16 %v807, %v803
    %v1032 = vpack.c.b16 %v808, %v804
    %v1033 = vpack.c.b16 %v809, %v805
    %v1034 = vpack.c.b16 %v814, %v810
    %v1035 = vpack.c.b16 %v815, %v811
    %v1036 = vpack.c.b16 %v816, %v812
    %v1037 = vpack.c.b16 %v817, %v813
    %v1038 = vpack.c.b16 %v822, %v818
    %v1039 = vpack.c.b16 %v823, %v819
    %v1040 = vpack.c.b16 %v824, %v820
    %v1041 = vpack.c.b16 %v825, %v821
    %v1042 = vpack.c.b16 %v830, %v826
    %v1043 = vpack.c.b16 %v831, %v827
    %v1044 = vpack.c.b16 %v832, %v828
    %v1045 = vpack.c.b16 %v833, %v829
    %v1046 = vpack.c.b16 %v838, %v834
    %v1047 = vpack.c.b16 %v839, %v835
    %v1048 = vpack.c.b16 %v840, %v836
    %v1049 = vpack.c.b16 %v841, %v837
    %v1050 = vpack.c.b16 %v846, %v842
    %v1051 = vpack.c.b16 %v847, %v843
    %v1052 = vpack.c.b16 %v848, %v844
    %v1053 = vpack.c.b16 %v849, %v845
    %v1054 = vpack.c.b16 %v854, %v850
    %v1055 = vpack.c.b16 %v855, %v851
    %v1056 = vpack.c.b16 %v856, %v852
    %v1057 = vpack.c.b16 %v857, %v853
    %v1058 = vpack.c.b16 %v862, %v858
    %v1059 = vpack.c.b16 %v863, %v859
    %v1060 = vpack.c.b16 %v864, %v860
    %v1061 = vpack.c.b16 %v865, %v861
    %vm1258 = vcmask 130048
    %v1260 = vsel %vm1258, %v71, 0
    %1262 = vmatpush.bf16.msra.mxu0 %v894
    %1263 = vmatpush.bf16.msra.mxu0 %v890
    %1264 = vmatpush.bf16.msra.mxu0 %v886
    %1265 = vmatpush.bf16.msra.mxu0 %v882
    %1266 = vmatpush.bf16.msra.mxu0 %v878
    %1267 = vmatpush.bf16.msra.mxu0 %v874
    %1268 = vmatpush.bf16.msra.mxu0 %v870
    %1269 = vmatpush.bf16.msra.mxu0 %v866
    %1270 = vmatmul.bf16.gmra.mxu0 %v65
    %v1271 = vpop.f32.mrf.mxu0
    %v1272 = vadd.f32 %v270, %v1271
    %v1273 = vpop.f32.mrf.mxu0
    %1274 = vdwg.mxu0
    %1275 = vmatpush.bf16.msra.mxu0 %v926
    %1276 = vmatpush.bf16.msra.mxu0 %v922
    %1277 = vmatpush.bf16.msra.mxu0 %v918
    %1278 = vmatpush.bf16.msra.mxu0 %v914
    %1279 = vmatpush.bf16.msra.mxu0 %v910
    %1280 = vmatpush.bf16.msra.mxu0 %v906
    %1281 = vmatpush.bf16.msra.mxu0 %v902
    %1282 = vmatpush.bf16.msra.mxu0 %v898
    %1283 = vmatmul.bf16.gmra.mxu0 %v66
    %v1284 = vpop.f32.mrf.mxu0
    %v1285 = vadd.f32 %v1272, %v1284
    %v1286 = vpop.f32.mrf.mxu0
    %1287 = vdwg.mxu0
    %1288 = vmatpush.bf16.msra.mxu0 %v958
    %1289 = vmatpush.bf16.msra.mxu0 %v954
    %1290 = vmatpush.bf16.msra.mxu0 %v950
    %1291 = vmatpush.bf16.msra.mxu0 %v946
    %1292 = vmatpush.bf16.msra.mxu0 %v942
    %1293 = vmatpush.bf16.msra.mxu0 %v938
    %1294 = vmatpush.bf16.msra.mxu0 %v934
    %1295 = vmatpush.bf16.msra.mxu0 %v930
    %1296 = vmatmul.bf16.gmra.mxu0 %v67
    %v1297 = vpop.f32.mrf.mxu0
    %v1298 = vadd.f32 %v1285, %v1297
    %v1299 = vpop.f32.mrf.mxu0
    %1300 = vdwg.mxu0
    %1301 = vmatpush.bf16.msra.mxu0 %v990
    %1302 = vmatpush.bf16.msra.mxu0 %v986
    %1303 = vmatpush.bf16.msra.mxu0 %v982
    %1304 = vmatpush.bf16.msra.mxu0 %v978
    %1305 = vmatpush.bf16.msra.mxu0 %v974
    %1306 = vmatpush.bf16.msra.mxu0 %v970
    %1307 = vmatpush.bf16.msra.mxu0 %v966
    %1308 = vmatpush.bf16.msra.mxu0 %v962
    %1309 = vmatmul.bf16.gmra.mxu0 %v68
    %v1310 = vpop.f32.mrf.mxu0
    %v1311 = vadd.f32 %v1298, %v1310
    %v1312 = vpop.f32.mrf.mxu0
    %1313 = vdwg.mxu0
    %1314 = vmatpush.bf16.msra.mxu0 %v1022
    %1315 = vmatpush.bf16.msra.mxu0 %v1018
    %1316 = vmatpush.bf16.msra.mxu0 %v1014
    %1317 = vmatpush.bf16.msra.mxu0 %v1010
    %1318 = vmatpush.bf16.msra.mxu0 %v1006
    %1319 = vmatpush.bf16.msra.mxu0 %v1002
    %1320 = vmatpush.bf16.msra.mxu0 %v998
    %1321 = vmatpush.bf16.msra.mxu0 %v994
    %1322 = vmatmul.bf16.gmra.mxu0 %v69
    %v1323 = vpop.f32.mrf.mxu0
    %v1324 = vadd.f32 %v1311, %v1323
    %v1325 = vpop.f32.mrf.mxu0
    %1326 = vdwg.mxu0
    %1327 = vmatpush.bf16.msra.mxu0 %v1054
    %1328 = vmatpush.bf16.msra.mxu0 %v1050
    %1329 = vmatpush.bf16.msra.mxu0 %v1046
    %1330 = vmatpush.bf16.msra.mxu0 %v1042
    %1331 = vmatpush.bf16.msra.mxu0 %v1038
    %1332 = vmatpush.bf16.msra.mxu0 %v1034
    %1333 = vmatpush.bf16.msra.mxu0 %v1030
    %1334 = vmatpush.bf16.msra.mxu0 %v1026
    %1335 = vmatmul.bf16.gmra.mxu0 %v70
    %v1336 = vpop.f32.mrf.mxu0
    %v1337 = vadd.f32 %v1324, %v1336
    %v1338 = vpop.f32.mrf.mxu0
    %1339 = vdwg.mxu0
    %1340 = vmatpush.bf16.msra.mxu0 0
    %1341 = vmatpush.bf16.msra.mxu0 0
    %1342 = vmatpush.bf16.msra.mxu0 0
    %1343 = vmatpush.bf16.msra.mxu0 0
    %1344 = vmatpush.bf16.msra.mxu0 0
    %1345 = vmatpush.bf16.msra.mxu0 0
    %1346 = vmatpush.bf16.msra.mxu0 0
    %1347 = vmatpush.bf16.msra.mxu0 %v1058
    %1348 = vmatmul.bf16.gmra.mxu0 %v1260
    %v1349 = vpop.f32.mrf.mxu0
    %v1350 = vadd.f32 %v1337, %v1349
    %v1351 = vpop.f32.mrf.mxu0
    %1352 = vdwg.mxu0
    %1353 = vmatpush.bf16.msra.mxu0 %v895
    %1354 = vmatpush.bf16.msra.mxu0 %v891
    %1355 = vmatpush.bf16.msra.mxu0 %v887
    %1356 = vmatpush.bf16.msra.mxu0 %v883
    %1357 = vmatpush.bf16.msra.mxu0 %v879
    %1358 = vmatpush.bf16.msra.mxu0 %v875
    %1359 = vmatpush.bf16.msra.mxu0 %v871
    %1360 = vmatpush.bf16.msra.mxu0 %v867
    %1361 = vmatmul.bf16.gmra.mxu0 %v65
    %v1362 = vpop.f32.mrf.mxu0
    %v1363 = vadd.f32 %v271, %v1362
    %v1364 = vpop.f32.mrf.mxu0
    %1365 = vdwg.mxu0
    %1366 = vmatpush.bf16.msra.mxu0 %v927
    %1367 = vmatpush.bf16.msra.mxu0 %v923
    %1368 = vmatpush.bf16.msra.mxu0 %v919
    %1369 = vmatpush.bf16.msra.mxu0 %v915
    %1370 = vmatpush.bf16.msra.mxu0 %v911
    %1371 = vmatpush.bf16.msra.mxu0 %v907
    %1372 = vmatpush.bf16.msra.mxu0 %v903
    %1373 = vmatpush.bf16.msra.mxu0 %v899
    %1374 = vmatmul.bf16.gmra.mxu0 %v66
    %v1375 = vpop.f32.mrf.mxu0
    %v1376 = vadd.f32 %v1363, %v1375
    %v1377 = vpop.f32.mrf.mxu0
    %1378 = vdwg.mxu0
    %1379 = vmatpush.bf16.msra.mxu0 %v959
    %1380 = vmatpush.bf16.msra.mxu0 %v955
    %1381 = vmatpush.bf16.msra.mxu0 %v951
    %1382 = vmatpush.bf16.msra.mxu0 %v947
    %1383 = vmatpush.bf16.msra.mxu0 %v943
    %1384 = vmatpush.bf16.msra.mxu0 %v939
    %1385 = vmatpush.bf16.msra.mxu0 %v935
    %1386 = vmatpush.bf16.msra.mxu0 %v931
    %1387 = vmatmul.bf16.gmra.mxu0 %v67
    %v1388 = vpop.f32.mrf.mxu0
    %v1389 = vadd.f32 %v1376, %v1388
    %v1390 = vpop.f32.mrf.mxu0
    %1391 = vdwg.mxu0
    %1392 = vmatpush.bf16.msra.mxu0 %v991
    %1393 = vmatpush.bf16.msra.mxu0 %v987
    %1394 = vmatpush.bf16.msra.mxu0 %v983
    %1395 = vmatpush.bf16.msra.mxu0 %v979
    %1396 = vmatpush.bf16.msra.mxu0 %v975
    %1397 = vmatpush.bf16.msra.mxu0 %v971
    %1398 = vmatpush.bf16.msra.mxu0 %v967
    %1399 = vmatpush.bf16.msra.mxu0 %v963
    %1400 = vmatmul.bf16.gmra.mxu0 %v68
    %v1401 = vpop.f32.mrf.mxu0
    %v1402 = vadd.f32 %v1389, %v1401
    %v1403 = vpop.f32.mrf.mxu0
    %1404 = vdwg.mxu0
    %1405 = vmatpush.bf16.msra.mxu0 %v1023
    %1406 = vmatpush.bf16.msra.mxu0 %v1019
    %1407 = vmatpush.bf16.msra.mxu0 %v1015
    %1408 = vmatpush.bf16.msra.mxu0 %v1011
    %1409 = vmatpush.bf16.msra.mxu0 %v1007
    %1410 = vmatpush.bf16.msra.mxu0 %v1003
    %1411 = vmatpush.bf16.msra.mxu0 %v999
    %1412 = vmatpush.bf16.msra.mxu0 %v995
    %1413 = vmatmul.bf16.gmra.mxu0 %v69
    %v1414 = vpop.f32.mrf.mxu0
    %v1415 = vadd.f32 %v1402, %v1414
    %v1416 = vpop.f32.mrf.mxu0
    %1417 = vdwg.mxu0
    %1418 = vmatpush.bf16.msra.mxu0 %v1055
    %1419 = vmatpush.bf16.msra.mxu0 %v1051
    %1420 = vmatpush.bf16.msra.mxu0 %v1047
    %1421 = vmatpush.bf16.msra.mxu0 %v1043
    %1422 = vmatpush.bf16.msra.mxu0 %v1039
    %1423 = vmatpush.bf16.msra.mxu0 %v1035
    %1424 = vmatpush.bf16.msra.mxu0 %v1031
    %1425 = vmatpush.bf16.msra.mxu0 %v1027
    %1426 = vmatmul.bf16.gmra.mxu0 %v70
    %v1427 = vpop.f32.mrf.mxu0
    %v1428 = vadd.f32 %v1415, %v1427
    %v1429 = vpop.f32.mrf.mxu0
    %1430 = vdwg.mxu0
    %1431 = vmatpush.bf16.msra.mxu0 0
    %1432 = vmatpush.bf16.msra.mxu0 0
    %1433 = vmatpush.bf16.msra.mxu0 0
    %1434 = vmatpush.bf16.msra.mxu0 0
    %1435 = vmatpush.bf16.msra.mxu0 0
    %1436 = vmatpush.bf16.msra.mxu0 0
    %1437 = vmatpush.bf16.msra.mxu0 0
    %1438 = vmatpush.bf16.msra.mxu0 %v1059
    %1439 = vmatmul.bf16.gmra.mxu0 %v1260
    %v1440 = vpop.f32.mrf.mxu0
    %v1441 = vadd.f32 %v1428, %v1440
    %v1442 = vpop.f32.mrf.mxu0
    %1443 = vdwg.mxu0
    %1444 = vmatpush.bf16.msra.mxu0 %v896
    %1445 = vmatpush.bf16.msra.mxu0 %v892
    %1446 = vmatpush.bf16.msra.mxu0 %v888
    %1447 = vmatpush.bf16.msra.mxu0 %v884
    %1448 = vmatpush.bf16.msra.mxu0 %v880
    %1449 = vmatpush.bf16.msra.mxu0 %v876
    %1450 = vmatpush.bf16.msra.mxu0 %v872
    %1451 = vmatpush.bf16.msra.mxu0 %v868
    %1452 = vmatmul.bf16.gmra.mxu0 %v65
    %v1453 = vpop.f32.mrf.mxu0
    %v1454 = vadd.f32 %v272, %v1453
    %v1455 = vpop.f32.mrf.mxu0
    %1456 = vdwg.mxu0
    %1457 = vmatpush.bf16.msra.mxu0 %v928
    %1458 = vmatpush.bf16.msra.mxu0 %v924
    %1459 = vmatpush.bf16.msra.mxu0 %v920
    %1460 = vmatpush.bf16.msra.mxu0 %v916
    %1461 = vmatpush.bf16.msra.mxu0 %v912
    %1462 = vmatpush.bf16.msra.mxu0 %v908
    %1463 = vmatpush.bf16.msra.mxu0 %v904
    %1464 = vmatpush.bf16.msra.mxu0 %v900
    %1465 = vmatmul.bf16.gmra.mxu0 %v66
    %v1466 = vpop.f32.mrf.mxu0
    %v1467 = vadd.f32 %v1454, %v1466
    %v1468 = vpop.f32.mrf.mxu0
    %1469 = vdwg.mxu0
    %1470 = vmatpush.bf16.msra.mxu0 %v960
    %1471 = vmatpush.bf16.msra.mxu0 %v956
    %1472 = vmatpush.bf16.msra.mxu0 %v952
    %1473 = vmatpush.bf16.msra.mxu0 %v948
    %1474 = vmatpush.bf16.msra.mxu0 %v944
    %1475 = vmatpush.bf16.msra.mxu0 %v940
    %1476 = vmatpush.bf16.msra.mxu0 %v936
    %1477 = vmatpush.bf16.msra.mxu0 %v932
    %1478 = vmatmul.bf16.gmra.mxu0 %v67
    %v1479 = vpop.f32.mrf.mxu0
    %v1480 = vadd.f32 %v1467, %v1479
    %v1481 = vpop.f32.mrf.mxu0
    %1482 = vdwg.mxu0
    %1483 = vmatpush.bf16.msra.mxu0 %v992
    %1484 = vmatpush.bf16.msra.mxu0 %v988
    %1485 = vmatpush.bf16.msra.mxu0 %v984
    %1486 = vmatpush.bf16.msra.mxu0 %v980
    %1487 = vmatpush.bf16.msra.mxu0 %v976
    %1488 = vmatpush.bf16.msra.mxu0 %v972
    %1489 = vmatpush.bf16.msra.mxu0 %v968
    %1490 = vmatpush.bf16.msra.mxu0 %v964
    %1491 = vmatmul.bf16.gmra.mxu0 %v68
    %v1492 = vpop.f32.mrf.mxu0
    %v1493 = vadd.f32 %v1480, %v1492
    %v1494 = vpop.f32.mrf.mxu0
    %1495 = vdwg.mxu0
    %1496 = vmatpush.bf16.msra.mxu0 %v1024
    %1497 = vmatpush.bf16.msra.mxu0 %v1020
    %1498 = vmatpush.bf16.msra.mxu0 %v1016
    %1499 = vmatpush.bf16.msra.mxu0 %v1012
    %1500 = vmatpush.bf16.msra.mxu0 %v1008
    %1501 = vmatpush.bf16.msra.mxu0 %v1004
    %1502 = vmatpush.bf16.msra.mxu0 %v1000
    %1503 = vmatpush.bf16.msra.mxu0 %v996
    %1504 = vmatmul.bf16.gmra.mxu0 %v69
    %v1505 = vpop.f32.mrf.mxu0
    %v1506 = vadd.f32 %v1493, %v1505
    %v1507 = vpop.f32.mrf.mxu0
    %1508 = vdwg.mxu0
    %1509 = vmatpush.bf16.msra.mxu0 %v1056
    %1510 = vmatpush.bf16.msra.mxu0 %v1052
    %1511 = vmatpush.bf16.msra.mxu0 %v1048
    %1512 = vmatpush.bf16.msra.mxu0 %v1044
    %1513 = vmatpush.bf16.msra.mxu0 %v1040
    %1514 = vmatpush.bf16.msra.mxu0 %v1036
    %1515 = vmatpush.bf16.msra.mxu0 %v1032
    %1516 = vmatpush.bf16.msra.mxu0 %v1028
    %1517 = vmatmul.bf16.gmra.mxu0 %v70
    %v1518 = vpop.f32.mrf.mxu0
    %v1519 = vadd.f32 %v1506, %v1518
    %v1520 = vpop.f32.mrf.mxu0
    %1521 = vdwg.mxu0
    %1522 = vmatpush.bf16.msra.mxu0 0
    %1523 = vmatpush.bf16.msra.mxu0 0
    %1524 = vmatpush.bf16.msra.mxu0 0
    %1525 = vmatpush.bf16.msra.mxu0 0
    %1526 = vmatpush.bf16.msra.mxu0 0
    %1527 = vmatpush.bf16.msra.mxu0 0
    %1528 = vmatpush.bf16.msra.mxu0 0
    %1529 = vmatpush.bf16.msra.mxu0 %v1060
    %1530 = vmatmul.bf16.gmra.mxu0 %v1260
    %v1531 = vpop.f32.mrf.mxu0
    %v1532 = vadd.f32 %v1519, %v1531
    %v1533 = vpop.f32.mrf.mxu0
    %1534 = vdwg.mxu0
    %1535 = vmatpush.bf16.msra.mxu0 %v897
    %1536 = vmatpush.bf16.msra.mxu0 %v893
    %1537 = vmatpush.bf16.msra.mxu0 %v889
    %1538 = vmatpush.bf16.msra.mxu0 %v885
    %1539 = vmatpush.bf16.msra.mxu0 %v881
    %1540 = vmatpush.bf16.msra.mxu0 %v877
    %1541 = vmatpush.bf16.msra.mxu0 %v873
    %1542 = vmatpush.bf16.msra.mxu0 %v869
    %1543 = vmatmul.bf16.gmra.mxu0 %v65
    %v1544 = vpop.f32.mrf.mxu0
    %v1545 = vadd.f32 %v273, %v1544
    %v1546 = vpop.f32.mrf.mxu0
    %1547 = vdwg.mxu0
    %1548 = vmatpush.bf16.msra.mxu0 %v929
    %1549 = vmatpush.bf16.msra.mxu0 %v925
    %1550 = vmatpush.bf16.msra.mxu0 %v921
    %1551 = vmatpush.bf16.msra.mxu0 %v917
    %1552 = vmatpush.bf16.msra.mxu0 %v913
    %1553 = vmatpush.bf16.msra.mxu0 %v909
    %1554 = vmatpush.bf16.msra.mxu0 %v905
    %1555 = vmatpush.bf16.msra.mxu0 %v901
    %1556 = vmatmul.bf16.gmra.mxu0 %v66
    %v1557 = vpop.f32.mrf.mxu0
    %v1558 = vadd.f32 %v1545, %v1557
    %v1559 = vpop.f32.mrf.mxu0
    %1560 = vdwg.mxu0
    %1561 = vmatpush.bf16.msra.mxu0 %v961
    %1562 = vmatpush.bf16.msra.mxu0 %v957
    %1563 = vmatpush.bf16.msra.mxu0 %v953
    %1564 = vmatpush.bf16.msra.mxu0 %v949
    %1565 = vmatpush.bf16.msra.mxu0 %v945
    %1566 = vmatpush.bf16.msra.mxu0 %v941
    %1567 = vmatpush.bf16.msra.mxu0 %v937
    %1568 = vmatpush.bf16.msra.mxu0 %v933
    %1569 = vmatmul.bf16.gmra.mxu0 %v67
    %v1570 = vpop.f32.mrf.mxu0
    %v1571 = vadd.f32 %v1558, %v1570
    %v1572 = vpop.f32.mrf.mxu0
    %1573 = vdwg.mxu0
    %1574 = vmatpush.bf16.msra.mxu0 %v993
    %1575 = vmatpush.bf16.msra.mxu0 %v989
    %1576 = vmatpush.bf16.msra.mxu0 %v985
    %1577 = vmatpush.bf16.msra.mxu0 %v981
    %1578 = vmatpush.bf16.msra.mxu0 %v977
    %1579 = vmatpush.bf16.msra.mxu0 %v973
    %1580 = vmatpush.bf16.msra.mxu0 %v969
    %1581 = vmatpush.bf16.msra.mxu0 %v965
    %1582 = vmatmul.bf16.gmra.mxu0 %v68
    %v1583 = vpop.f32.mrf.mxu0
    %v1584 = vadd.f32 %v1571, %v1583
    %v1585 = vpop.f32.mrf.mxu0
    %1586 = vdwg.mxu0
    %1587 = vmatpush.bf16.msra.mxu0 %v1025
    %1588 = vmatpush.bf16.msra.mxu0 %v1021
    %1589 = vmatpush.bf16.msra.mxu0 %v1017
    %1590 = vmatpush.bf16.msra.mxu0 %v1013
    %1591 = vmatpush.bf16.msra.mxu0 %v1009
    %1592 = vmatpush.bf16.msra.mxu0 %v1005
    %1593 = vmatpush.bf16.msra.mxu0 %v1001
    %1594 = vmatpush.bf16.msra.mxu0 %v997
    %1595 = vmatmul.bf16.gmra.mxu0 %v69
    %v1596 = vpop.f32.mrf.mxu0
    %v1597 = vadd.f32 %v1584, %v1596
    %v1598 = vpop.f32.mrf.mxu0
    %1599 = vdwg.mxu0
    %1600 = vmatpush.bf16.msra.mxu0 %v1057
    %1601 = vmatpush.bf16.msra.mxu0 %v1053
    %1602 = vmatpush.bf16.msra.mxu0 %v1049
    %1603 = vmatpush.bf16.msra.mxu0 %v1045
    %1604 = vmatpush.bf16.msra.mxu0 %v1041
    %1605 = vmatpush.bf16.msra.mxu0 %v1037
    %1606 = vmatpush.bf16.msra.mxu0 %v1033
    %1607 = vmatpush.bf16.msra.mxu0 %v1029
    %1608 = vmatmul.bf16.gmra.mxu0 %v70
    %v1609 = vpop.f32.mrf.mxu0
    %v1610 = vadd.f32 %v1597, %v1609
    %v1611 = vpop.f32.mrf.mxu0
    %1612 = vdwg.mxu0
    %1613 = vmatpush.bf16.msra.mxu0 0
    %1614 = vmatpush.bf16.msra.mxu0 0
    %1615 = vmatpush.bf16.msra.mxu0 0
    %1616 = vmatpush.bf16.msra.mxu0 0
    %1617 = vmatpush.bf16.msra.mxu0 0
    %1618 = vmatpush.bf16.msra.mxu0 0
    %1619 = vmatpush.bf16.msra.mxu0 0
    %1620 = vmatpush.bf16.msra.mxu0 %v1061
    %1621 = vmatmul.bf16.gmra.mxu0 %v1260
    %v1622 = vpop.f32.mrf.mxu0
    %v1623 = vadd.f32 %v1610, %v1622
    %v1624 = vpop.f32.mrf.mxu0
    %1625 = vdwg.mxu0
    %v1626 = vmax.f32 %v1350, 0.0
    %v1627 = vmax.f32 %v1441, 0.0
    %v1628 = vmax.f32 %v1532, 0.0
    %v1629 = vmax.f32 %v1623, 0.0
    %v1630 = vpack.c.bf16 %v1626, %v1626
    %v1631 = vpack.c.bf16 %v1627, %v1627
    %v1632 = vpack.c.bf16 %v1628, %v1628
    %v1633 = vpack.c.bf16 %v1629, %v1629
    %v1634 = vld [vmem:[#allocation4] sm:$0xff]
    %v1635 = vld [vmem:[#allocation4 + $0x8] sm:$0xff]
    %v1636 = vld [vmem:[#allocation4 + $0x10] sm:$0xff]
    %v1637 = vld [vmem:[#allocation4 + $0x18] sm:$0xff]
    %v1638 = vld [vmem:[#allocation4 + $0x20] sm:$0xff]
    %v1639 = vld [vmem:[#allocation4 + $0x28] sm:$0xff]
    %v1640 = vld [vmem:[#allocation4 + $0x30] sm:$0xff]
    %v1641 = vld [vmem:[#allocation4 + $0x38] sm:$0xff]
    %v1642 = vld [vmem:[#allocation4 + $0x40] sm:$0xff]
    %v1643 = vld [vmem:[#allocation4 + $0x48] sm:$0xff]
    %v1644 = vld [vmem:[#allocation4 + $0x50] sm:$0xff]
    %v1645 = vld [vmem:[#allocation4 + $0x58] sm:$0xff]
    %v1646 = vld [vmem:[#allocation4 + $0x60] sm:$0xff]
    %v1647 = vld [vmem:[#allocation4 + $0x68] sm:$0xff]
    %v1648 = vld [vmem:[#allocation4 + $0x70] sm:$0xff]
    %v1649 = vld [vmem:[#allocation4 + $0x78] sm:$0xff]
    %v1650 = vld [vmem:[#allocation4 + $0x80] sm:$0xff]
    %v1651 = vld [vmem:[#allocation4 + $0x88] sm:$0xff]
    %v1652 = vld [vmem:[#allocation4 + $0x90] sm:$0xff]
    %v1653 = vld [vmem:[#allocation4 + $0x98] sm:$0xff]
    %v1654 = vld [vmem:[#allocation4 + $0xa0] sm:$0xff]
    %v1655 = vld [vmem:[#allocation4 + $0xa8] sm:$0xff]
    %v1656 = vld [vmem:[#allocation4 + $0xb0] sm:$0xff]
    %v1657 = vld [vmem:[#allocation4 + $0xb8] sm:$0xff]
    %v1658 = vld [vmem:[#allocation4 + $0xc0] sm:$0xff]
    %v1659 = vld [vmem:[#allocation4 + $0xc8] sm:$0xff]
    %v1660 = vld [vmem:[#allocation4 + $0xd0] sm:$0xff]
    %v1661 = vld [vmem:[#allocation4 + $0xd8] sm:$0xff]
    %v1662 = vld [vmem:[#allocation4 + $0xe0] sm:$0xff]
    %v1663 = vld [vmem:[#allocation4 + $0xe8] sm:$0xff]
    %v1664 = vld [vmem:[#allocation4 + $0xf0] sm:$0xff]
    %v1665 = vld [vmem:[#allocation4 + $0xf8] sm:$0xff]
    %v1666 = vld [vmem:[#allocation4 + $0x100] sm:$0xff]
    %v1667 = vld [vmem:[#allocation4 + $0x108] sm:$0xff]
    %v1668 = vld [vmem:[#allocation4 + $0x110] sm:$0xff]
    %v1669 = vld [vmem:[#allocation4 + $0x118] sm:$0xff]
    %v1670 = vld [vmem:[#allocation4 + $0x120] sm:$0xff]
    %v1671 = vld [vmem:[#allocation4 + $0x128] sm:$0xff]
    %v1672 = vld [vmem:[#allocation4 + $0x130] sm:$0xff]
    %v1673 = vld [vmem:[#allocation4 + $0x138] sm:$0xff]
    %v1674 = vld [vmem:[#allocation4 + $0x140] sm:$0xff]
    %v1675 = vld [vmem:[#allocation4 + $0x148] sm:$0xff]
    %v1676 = vld [vmem:[#allocation4 + $0x150] sm:$0xff]
    %v1677 = vld [vmem:[#allocation4 + $0x158] sm:$0xff]
    %v1678 = vld [vmem:[#allocation4 + $0x160] sm:$0xff]
    %v1679 = vld [vmem:[#allocation4 + $0x168] sm:$0xff]
    %v1680 = vld [vmem:[#allocation4 + $0x170] sm:$0xff]
    %v1681 = vld [vmem:[#allocation4 + $0x178] sm:$0xff]
    %v1682 = vld [vmem:[#allocation4 + $0x180] sm:$0xff]
    %v1683 = vld [vmem:[#allocation4 + $0x188] sm:$0xff]
    %v1684 = vld [vmem:[#allocation4 + $0x190] sm:$0xff]
    %v1685 = vld [vmem:[#allocation4 + $0x198] sm:$0xff]
    %v1686 = vld [vmem:[#allocation4 + $0x1a0] sm:$0xff]
    %v1687 = vld [vmem:[#allocation4 + $0x1a8] sm:$0xff]
    %v1688 = vld [vmem:[#allocation4 + $0x1b0] sm:$0xff]
    %v1689 = vld [vmem:[#allocation4 + $0x1b8] sm:$0xff]
    %v1690 = vld [vmem:[#allocation4 + $0x1c0] sm:$0xff]
    %v1691 = vld [vmem:[#allocation4 + $0x1c8] sm:$0xff]
    %v1692 = vld [vmem:[#allocation4 + $0x1d0] sm:$0xff]
    %v1693 = vld [vmem:[#allocation4 + $0x1d8] sm:$0xff]
    %v1694 = vld [vmem:[#allocation4 + $0x1e0] sm:$0xff]
    %v1695 = vld [vmem:[#allocation4 + $0x1e8] sm:$0xff]
    %v1696 = vld [vmem:[#allocation4 + $0x1f0] sm:$0xff]
    %v1697 = vld [vmem:[#allocation4 + $0x1f8] sm:$0xff]
    %v1698 = vld [vmem:[%s4] sm:$0x3]
    %v1700 = vperm.slane %v1698, 0
    %v1701 = vperm.slane %v1698, 1
    %v1768 = vunpack.c.l.b16 %v1634
    %v1769 = vunpack.c.h.b16 %v1634
    %v1770 = vunpack.c.l.b16 %v1635
    %v1771 = vunpack.c.h.b16 %v1635
    %v1772 = vunpack.c.l.b16 %v1636
    %v1773 = vunpack.c.h.b16 %v1636
    %v1774 = vunpack.c.l.b16 %v1637
    %v1775 = vunpack.c.h.b16 %v1637
    %v1776 = vunpack.c.l.b16 %v1638
    %v1777 = vunpack.c.h.b16 %v1638
    %v1778 = vunpack.c.l.b16 %v1639
    %v1779 = vunpack.c.h.b16 %v1639
    %v1780 = vunpack.c.l.b16 %v1640
    %v1781 = vunpack.c.h.b16 %v1640
    %v1782 = vunpack.c.l.b16 %v1641
    %v1783 = vunpack.c.h.b16 %v1641
    %v1784 = vunpack.c.l.b16 %v1642
    %v1785 = vunpack.c.h.b16 %v1642
    %v1786 = vunpack.c.l.b16 %v1643
    %v1787 = vunpack.c.h.b16 %v1643
    %v1788 = vunpack.c.l.b16 %v1644
    %v1789 = vunpack.c.h.b16 %v1644
    %v1790 = vunpack.c.l.b16 %v1645
    %v1791 = vunpack.c.h.b16 %v1645
    %v1792 = vunpack.c.l.b16 %v1646
    %v1793 = vunpack.c.h.b16 %v1646
    %v1794 = vunpack.c.l.b16 %v1647
    %v1795 = vunpack.c.h.b16 %v1647
    %v1796 = vunpack.c.l.b16 %v1648
    %v1797 = vunpack.c.h.b16 %v1648
    %v1798 = vunpack.c.l.b16 %v1649
    %v1799 = vunpack.c.h.b16 %v1649
    %v1800 = vunpack.c.l.b16 %v1650
    %v1801 = vunpack.c.h.b16 %v1650
    %v1802 = vunpack.c.l.b16 %v1651
    %v1803 = vunpack.c.h.b16 %v1651
    %v1804 = vunpack.c.l.b16 %v1652
    %v1805 = vunpack.c.h.b16 %v1652
    %v1806 = vunpack.c.l.b16 %v1653
    %v1807 = vunpack.c.h.b16 %v1653
    %v1808 = vunpack.c.l.b16 %v1654
    %v1809 = vunpack.c.h.b16 %v1654
    %v1810 = vunpack.c.l.b16 %v1655
    %v1811 = vunpack.c.h.b16 %v1655
    %v1812 = vunpack.c.l.b16 %v1656
    %v1813 = vunpack.c.h.b16 %v1656
    %v1814 = vunpack.c.l.b16 %v1657
    %v1815 = vunpack.c.h.b16 %v1657
    %v1816 = vunpack.c.l.b16 %v1658
    %v1817 = vunpack.c.h.b16 %v1658
    %v1818 = vunpack.c.l.b16 %v1659
    %v1819 = vunpack.c.h.b16 %v1659
    %v1820 = vunpack.c.l.b16 %v1660
    %v1821 = vunpack.c.h.b16 %v1660
    %v1822 = vunpack.c.l.b16 %v1661
    %v1823 = vunpack.c.h.b16 %v1661
    %v1824 = vunpack.c.l.b16 %v1662
    %v1825 = vunpack.c.h.b16 %v1662
    %v1826 = vunpack.c.l.b16 %v1663
    %v1827 = vunpack.c.h.b16 %v1663
    %v1828 = vunpack.c.l.b16 %v1664
    %v1829 = vunpack.c.h.b16 %v1664
    %v1830 = vunpack.c.l.b16 %v1665
    %v1831 = vunpack.c.h.b16 %v1665
    %v1832 = vunpack.c.l.b16 %v1666
    %v1833 = vunpack.c.h.b16 %v1666
    %v1834 = vunpack.c.l.b16 %v1667
    %v1835 = vunpack.c.h.b16 %v1667
    %v1836 = vunpack.c.l.b16 %v1668
    %v1837 = vunpack.c.h.b16 %v1668
    %v1838 = vunpack.c.l.b16 %v1669
    %v1839 = vunpack.c.h.b16 %v1669
    %v1840 = vunpack.c.l.b16 %v1670
    %v1841 = vunpack.c.h.b16 %v1670
    %v1842 = vunpack.c.l.b16 %v1671
    %v1843 = vunpack.c.h.b16 %v1671
    %v1844 = vunpack.c.l.b16 %v1672
    %v1845 = vunpack.c.h.b16 %v1672
    %v1846 = vunpack.c.l.b16 %v1673
    %v1847 = vunpack.c.h.b16 %v1673
    %v1848 = vunpack.c.l.b16 %v1674
    %v1849 = vunpack.c.h.b16 %v1674
    %v1850 = vunpack.c.l.b16 %v1675
    %v1851 = vunpack.c.h.b16 %v1675
    %v1852 = vunpack.c.l.b16 %v1676
    %v1853 = vunpack.c.h.b16 %v1676
    %v1854 = vunpack.c.l.b16 %v1677
    %v1855 = vunpack.c.h.b16 %v1677
    %v1856 = vunpack.c.l.b16 %v1678
    %v1857 = vunpack.c.h.b16 %v1678
    %v1858 = vunpack.c.l.b16 %v1679
    %v1859 = vunpack.c.h.b16 %v1679
    %v1860 = vunpack.c.l.b16 %v1680
    %v1861 = vunpack.c.h.b16 %v1680
    %v1862 = vunpack.c.l.b16 %v1681
    %v1863 = vunpack.c.h.b16 %v1681
    %v1864 = vunpack.c.l.b16 %v1682
    %v1865 = vunpack.c.h.b16 %v1682
    %v1866 = vunpack.c.l.b16 %v1683
    %v1867 = vunpack.c.h.b16 %v1683
    %v1868 = vunpack.c.l.b16 %v1684
    %v1869 = vunpack.c.h.b16 %v1684
    %v1870 = vunpack.c.l.b16 %v1685
    %v1871 = vunpack.c.h.b16 %v1685
    %v1872 = vunpack.c.l.b16 %v1686
    %v1873 = vunpack.c.h.b16 %v1686
    %v1874 = vunpack.c.l.b16 %v1687
    %v1875 = vunpack.c.h.b16 %v1687
    %v1876 = vunpack.c.l.b16 %v1688
    %v1877 = vunpack.c.h.b16 %v1688
    %v1878 = vunpack.c.l.b16 %v1689
    %v1879 = vunpack.c.h.b16 %v1689
    %v1880 = vunpack.c.l.b16 %v1690
    %v1881 = vunpack.c.h.b16 %v1690
    %v1882 = vunpack.c.l.b16 %v1691
    %v1883 = vunpack.c.h.b16 %v1691
    %v1884 = vunpack.c.l.b16 %v1692
    %v1885 = vunpack.c.h.b16 %v1692
    %v1886 = vunpack.c.l.b16 %v1693
    %v1887 = vunpack.c.h.b16 %v1693
    %v1888 = vunpack.c.l.b16 %v1694
    %v1889 = vunpack.c.h.b16 %v1694
    %v1890 = vunpack.c.l.b16 %v1695
    %v1891 = vunpack.c.h.b16 %v1695
    %v1892 = vunpack.c.l.b16 %v1696
    %v1893 = vunpack.c.h.b16 %v1696
    %v1894 = vunpack.c.l.b16 %v1697
    %v1895 = vunpack.c.h.b16 %v1697
    %v1896 = vpack.c.b16 %v1770, %v1768
    %v1897 = vpack.c.b16 %v1771, %v1769
    %v1898 = vpack.c.b16 %v1774, %v1772
    %v1899 = vpack.c.b16 %v1775, %v1773
    %v1900 = vpack.c.b16 %v1778, %v1776
    %v1901 = vpack.c.b16 %v1779, %v1777
    %v1902 = vpack.c.b16 %v1782, %v1780
    %v1903 = vpack.c.b16 %v1783, %v1781
    %v1904 = vpack.c.b16 %v1786, %v1784
    %v1905 = vpack.c.b16 %v1787, %v1785
    %v1906 = vpack.c.b16 %v1790, %v1788
    %v1907 = vpack.c.b16 %v1791, %v1789
    %v1908 = vpack.c.b16 %v1794, %v1792
    %v1909 = vpack.c.b16 %v1795, %v1793
    %v1910 = vpack.c.b16 %v1798, %v1796
    %v1911 = vpack.c.b16 %v1799, %v1797
    %v1912 = vpack.c.b16 %v1802, %v1800
    %v1913 = vpack.c.b16 %v1803, %v1801
    %v1914 = vpack.c.b16 %v1806, %v1804
    %v1915 = vpack.c.b16 %v1807, %v1805
    %v1916 = vpack.c.b16 %v1810, %v1808
    %v1917 = vpack.c.b16 %v1811, %v1809
    %v1918 = vpack.c.b16 %v1814, %v1812
    %v1919 = vpack.c.b16 %v1815, %v1813
    %v1920 = vpack.c.b16 %v1818, %v1816
    %v1921 = vpack.c.b16 %v1819, %v1817
    %v1922 = vpack.c.b16 %v1822, %v1820
    %v1923 = vpack.c.b16 %v1823, %v1821
    %v1924 = vpack.c.b16 %v1826, %v1824
    %v1925 = vpack.c.b16 %v1827, %v1825
    %v1926 = vpack.c.b16 %v1830, %v1828
    %v1927 = vpack.c.b16 %v1831, %v1829
    %v1928 = vpack.c.b16 %v1834, %v1832
    %v1929 = vpack.c.b16 %v1835, %v1833
    %v1930 = vpack.c.b16 %v1838, %v1836
    %v1931 = vpack.c.b16 %v1839, %v1837
    %v1932 = vpack.c.b16 %v1842, %v1840
    %v1933 = vpack.c.b16 %v1843, %v1841
    %v1934 = vpack.c.b16 %v1846, %v1844
    %v1935 = vpack.c.b16 %v1847, %v1845
    %v1936 = vpack.c.b16 %v1850, %v1848
    %v1937 = vpack.c.b16 %v1851, %v1849
    %v1938 = vpack.c.b16 %v1854, %v1852
    %v1939 = vpack.c.b16 %v1855, %v1853
    %v1940 = vpack.c.b16 %v1858, %v1856
    %v1941 = vpack.c.b16 %v1859, %v1857
    %v1942 = vpack.c.b16 %v1862, %v1860
    %v1943 = vpack.c.b16 %v1863, %v1861
    %v1944 = vpack.c.b16 %v1866, %v1864
    %v1945 = vpack.c.b16 %v1867, %v1865
    %v1946 = vpack.c.b16 %v1870, %v1868
    %v1947 = vpack.c.b16 %v1871, %v1869
    %v1948 = vpack.c.b16 %v1874, %v1872
    %v1949 = vpack.c.b16 %v1875, %v1873
    %v1950 = vpack.c.b16 %v1878, %v1876
    %v1951 = vpack.c.b16 %v1879, %v1877
    %v1952 = vpack.c.b16 %v1882, %v1880
    %v1953 = vpack.c.b16 %v1883, %v1881
    %v1954 = vpack.c.b16 %v1886, %v1884
    %v1955 = vpack.c.b16 %v1887, %v1885
    %v1956 = vpack.c.b16 %v1890, %v1888
    %v1957 = vpack.c.b16 %v1891, %v1889
    %v1958 = vpack.c.b16 %v1894, %v1892
    %v1959 = vpack.c.b16 %v1895, %v1893
    %2024 = vmatpush.bf16.msra.mxu0 %v1910
    %2025 = vmatpush.bf16.msra.mxu0 %v1908
    %2026 = vmatpush.bf16.msra.mxu0 %v1906
    %2027 = vmatpush.bf16.msra.mxu0 %v1904
    %2028 = vmatpush.bf16.msra.mxu0 %v1902
    %2029 = vmatpush.bf16.msra.mxu0 %v1900
    %2030 = vmatpush.bf16.msra.mxu0 %v1898
    %2031 = vmatpush.bf16.msra.mxu0 %v1896
    %2032 = vmatmul.bf16.gmra.mxu0 %v1630
    %v2033 = vpop.f32.mrf.mxu0
    %v2034 = vadd.f32 %v1700, %v2033
    %v2035 = vpop.f32.mrf.mxu0
    %2036 = vdwg.mxu0
    %2037 = vmatpush.bf16.msra.mxu0 %v1926
    %2038 = vmatpush.bf16.msra.mxu0 %v1924
    %2039 = vmatpush.bf16.msra.mxu0 %v1922
    %2040 = vmatpush.bf16.msra.mxu0 %v1920
    %2041 = vmatpush.bf16.msra.mxu0 %v1918
    %2042 = vmatpush.bf16.msra.mxu0 %v1916
    %2043 = vmatpush.bf16.msra.mxu0 %v1914
    %2044 = vmatpush.bf16.msra.mxu0 %v1912
    %2045 = vmatmul.bf16.gmra.mxu0 %v1631
    %v2046 = vpop.f32.mrf.mxu0
    %v2047 = vadd.f32 %v2034, %v2046
    %v2048 = vpop.f32.mrf.mxu0
    %2049 = vdwg.mxu0
    %2050 = vmatpush.bf16.msra.mxu0 %v1942
    %2051 = vmatpush.bf16.msra.mxu0 %v1940
    %2052 = vmatpush.bf16.msra.mxu0 %v1938
    %2053 = vmatpush.bf16.msra.mxu0 %v1936
    %2054 = vmatpush.bf16.msra.mxu0 %v1934
    %2055 = vmatpush.bf16.msra.mxu0 %v1932
    %2056 = vmatpush.bf16.msra.mxu0 %v1930
    %2057 = vmatpush.bf16.msra.mxu0 %v1928
    %2058 = vmatmul.bf16.gmra.mxu0 %v1632
    %v2059 = vpop.f32.mrf.mxu0
    %v2060 = vadd.f32 %v2047, %v2059
    %v2061 = vpop.f32.mrf.mxu0
    %2062 = vdwg.mxu0
    %2063 = vmatpush.bf16.msra.mxu0 %v1958
    %2064 = vmatpush.bf16.msra.mxu0 %v1956
    %2065 = vmatpush.bf16.msra.mxu0 %v1954
    %2066 = vmatpush.bf16.msra.mxu0 %v1952
    %2067 = vmatpush.bf16.msra.mxu0 %v1950
    %2068 = vmatpush.bf16.msra.mxu0 %v1948
    %2069 = vmatpush.bf16.msra.mxu0 %v1946
    %2070 = vmatpush.bf16.msra.mxu0 %v1944
    %2071 = vmatmul.bf16.gmra.mxu0 %v1633
    %v2072 = vpop.f32.mrf.mxu0
    %v2073 = vadd.f32 %v2060, %v2072
    %v2074 = vpop.f32.mrf.mxu0
    %2075 = vdwg.mxu0
    %2076 = vmatpush.bf16.msra.mxu0 %v1911
    %2077 = vmatpush.bf16.msra.mxu0 %v1909
    %2078 = vmatpush.bf16.msra.mxu0 %v1907
    %2079 = vmatpush.bf16.msra.mxu0 %v1905
    %2080 = vmatpush.bf16.msra.mxu0 %v1903
    %2081 = vmatpush.bf16.msra.mxu0 %v1901
    %2082 = vmatpush.bf16.msra.mxu0 %v1899
    %2083 = vmatpush.bf16.msra.mxu0 %v1897
    %2084 = vmatmul.bf16.gmra.mxu0 %v1630
    %v2085 = vpop.f32.mrf.mxu0
    %v2086 = vadd.f32 %v1701, %v2085
    %v2087 = vpop.f32.mrf.mxu0
    %2088 = vdwg.mxu0
    %2089 = vmatpush.bf16.msra.mxu0 %v1927
    %2090 = vmatpush.bf16.msra.mxu0 %v1925
    %2091 = vmatpush.bf16.msra.mxu0 %v1923
    %2092 = vmatpush.bf16.msra.mxu0 %v1921
    %2093 = vmatpush.bf16.msra.mxu0 %v1919
    %2094 = vmatpush.bf16.msra.mxu0 %v1917
    %2095 = vmatpush.bf16.msra.mxu0 %v1915
    %2096 = vmatpush.bf16.msra.mxu0 %v1913
    %2097 = vmatmul.bf16.gmra.mxu0 %v1631
    %v2098 = vpop.f32.mrf.mxu0
    %v2099 = vadd.f32 %v2086, %v2098
    %v2100 = vpop.f32.mrf.mxu0
    %2101 = vdwg.mxu0
    %2102 = vmatpush.bf16.msra.mxu0 %v1943
    %2103 = vmatpush.bf16.msra.mxu0 %v1941
    %2104 = vmatpush.bf16.msra.mxu0 %v1939
    %2105 = vmatpush.bf16.msra.mxu0 %v1937
    %2106 = vmatpush.bf16.msra.mxu0 %v1935
    %2107 = vmatpush.bf16.msra.mxu0 %v1933
    %2108 = vmatpush.bf16.msra.mxu0 %v1931
    %2109 = vmatpush.bf16.msra.mxu0 %v1929
    %2110 = vmatmul.bf16.gmra.mxu0 %v1632
    %v2111 = vpop.f32.mrf.mxu0
    %v2112 = vadd.f32 %v2099, %v2111
    %v2113 = vpop.f32.mrf.mxu0
    %2114 = vdwg.mxu0
    %2115 = vmatpush.bf16.msra.mxu0 %v1959
    %2116 = vmatpush.bf16.msra.mxu0 %v1957
    %2117 = vmatpush.bf16.msra.mxu0 %v1955
    %2118 = vmatpush.bf16.msra.mxu0 %v1953
    %2119 = vmatpush.bf16.msra.mxu0 %v1951
    %2120 = vmatpush.bf16.msra.mxu0 %v1949
    %2121 = vmatpush.bf16.msra.mxu0 %v1947
    %2122 = vmatpush.bf16.msra.mxu0 %v1945
    %2123 = vmatmul.bf16.gmra.mxu0 %v1633
    %v2124 = vpop.f32.mrf.mxu0
    %v2125 = vadd.f32 %v2112, %v2124
    %v2126 = vpop.f32.mrf.mxu0
    %2127 = vdwg.mxu0
    %v2128 = vmul.f32 %v2125, 1.442695
    %v2129 = vpow.pop %v2128
    %v2130 = vld [vmem:[%s5] sm:$0xff]
    %v2131 = vmul.f32 %v2129, %v2130
    %v2132 = vadd.f32 %v2073, %v2131
    %2133 = vst [vmem:[%s6] sm:$0xff] %v2132
    %v2134 = vmul.f32 %v2129, %v2129
    %v2135 = vmul.f32 %v2073, %v2073
    %v2136 = vadd.f32 %v2134, %v2135
    %v2137 = vsub.f32 %v2136, %v2125
    %v2138 = vsub.f32 %v2137, 0.5
    %v2139 = vlaneseq
    %v2140 = vshrl.u32 %v2139, 7
    %s2141 = smul.u32 0, 8
    %v2142 = vstv %s2141
    %v2143 = vadd.s32 %v2140, %v2142
    %v2144 = vlaneseq
    %v2145 = vand.u32 %v2144, 127
    %vm2146 = vcmp.lt.s32.totalorder %v2143, 2
    %vm2147 = vcmp.lt.s32.totalorder %v2145, 32
    %vm2148 = vmand %vm2146, %vm2147
    %v2149 = vsel %vm2148, %v2138, 0.0
    %2150 = vadd.xlane.f32.xlu0 %v2149
    %v2151 = vpop.xlane.xlu0 %2150
    %v2152 = vrot.slane %v2151, 4
    %v2153 = vadd.f32 %v2151, %v2152
    %v2154 = vrot.slane %v2153, 2
    %v2155 = vadd.f32 %v2153, %v2154
    %v2156 = vrot.slane %v2155, 1
    %v2157 = vadd.f32 %v2155, %v2156
    %s2158 = vtos %v2157
    %v2159 = vstv %s2158
    %2160 = vst [vmem:[%s7] sm:$0xff] %v2159
    // Predicated region
    $region34: #{variational_encoder_forward.1} parent=1 // pred_check
      _
    $region35: #{variational_encoder_forward.1} parent=1 // pred_check_branch
      %2162 = sbr.rel (0) target = $region37
    $region36: #{variational_encoder_forward.1} parent=1 // pred_region
      _
    $region37: #{variational_encoder_forward.1} parent=1 // pred_fallthru
      _
    // Predicated region
    $region38: #{variational_encoder_forward.1} parent=1 // pred_check
      _
    $region39: #{variational_encoder_forward.1} parent=1 // pred_check_branch
      %2164 = sbr.rel (0) target = $region41
    $region40: #{variational_encoder_forward.1} parent=1 // pred_region
      _
    $region41: #{variational_encoder_forward.1} parent=1 // pred_fallthru
      _
    // Predicated region
    $region42: #{variational_encoder_forward.1} parent=1 // pred_check
      _
    $region43: #{variational_encoder_forward.1} parent=1 // pred_check_branch
      %2166 = sbr.rel (0) target = $region45
    $region44: #{variational_encoder_forward.1} parent=1 // pred_region
      _
    $region45: #{variational_encoder_forward.1} parent=1 // pred_fallthru
      _
    // Predicated region
    $region46: #{variational_encoder_forward.1} parent=1 // pred_check
      _
    $region47: #{variational_encoder_forward.1} parent=1 // pred_check_branch
      %2168 = sbr.rel (0) target = $region49
    $region48: #{variational_encoder_forward.1} parent=1 // pred_region
      _
    $region49: #{variational_encoder_forward.1} parent=1 // pred_fallthru
      _
    %2169 = vsyncpa [#allocation3], 1
    %2170 = vsyncpa [#allocation5], 1

</llo_original>
